<compile_context>
chip_gen: v6e
topology: v6e:2x2x1
jax: 0.10.0
libtpu: 0.0.40
codegen_flags: <defaults>
</compile_context>

<pallas_src>
import math

import jax
import jax.numpy as jnp
import numpy as np
from jax.experimental import pallas as pl
from jax.experimental.pallas import tpu as pltpu


def mhsa_kernel(x_ref, wfused_ref, msum_ref, gsum_ref, rexp_ref, wf_ref, bf_ref,
                o_ref):
    HF = msum_ref.shape[0]                                        # H * F (static)
    x = x_ref[...]                                                # (TB, F)

    # Single wide MXU push for all projections / all (i, j) head pairs.
    qkv = jnp.dot(x, wfused_ref[...],
                  preferred_element_type=jnp.float32)             # (TB, 3*HF)
    qr = qkv[:, 0 * HF:1 * HF]    # q_head_i replicated over j (scale folded in)
    kr = qkv[:, 1 * HF:2 * HF]    # k_head_j replicated over i
    vr = qkv[:, 2 * HF:3 * HF]    # v_head_j replicated over i

    # scores[b, i*H+j] = sum_d q_i[d] * k_j[d] / sqrt(D): block-sum on the MXU.
    s = jnp.dot(qr * kr, msum_ref[...],
                preferred_element_type=jnp.float32)               # (TB, H*H)

    # Softmax over key-heads j (global per-row max is constant across j -> exact).
    m = jnp.max(s, axis=-1, keepdims=True)
    e = jnp.exp(s - m)
    denom = jnp.dot(e, gsum_ref[...],
                    preferred_element_type=jnp.float32)           # per-query-head sums
    w = e * pl.reciprocal(denom, approx=True)                     # EUP vrcp (free slot)

    # out[b, i*D+d] = sum_j w[b,i,j] * v[b,j,d]; the j-sum, the torch
    # transpose(1,2) reorder and the final Linear are all folded into wf_ref.
    w_exp = jnp.dot(w, rexp_ref[...],
                    preferred_element_type=jnp.float32)           # (TB, HF)
    p2 = w_exp * vr
    o_ref[...] = jnp.dot(p2, wf_ref[...],
                         preferred_element_type=jnp.float32) + bf_ref[...]


def mhsa_pallas(x, w_fused, m_sum, g_sum, r_exp, wf_fold, bf, *, tile_b=None):
    B, F = x.shape
    O = wf_fold.shape[1]

    # Pick a batch tile (multiple of 8 f32 sublanes) and pad the batch to it.
    if tile_b is None:
        tile_b = min(max(8, B), 256)
    TB = max(8, (tile_b // 8) * 8)
    B_pad = ((B + TB - 1) // TB) * TB
    x_p = x if B_pad == B else jnp.pad(x, ((0, B_pad - B), (0, 0)))

    def const2d(arr):
        return pl.BlockSpec(arr.shape, lambda i: (0, 0))

    y = pl.pallas_call(
        mhsa_kernel,
        out_shape=jax.ShapeDtypeStruct((B_pad, O), jnp.float32),
        grid=(B_pad // TB,),
        in_specs=[
            pl.BlockSpec((TB, F), lambda i: (i, 0)),   # x tile over batch
            const2d(w_fused),                          # fused q/k/v pair projection
            const2d(m_sum),                            # block-sum (scores)
            const2d(g_sum),                            # group-sum (softmax denom)
            const2d(r_exp),                            # weight lane-expansion
            const2d(wf_fold),                          # gather + perm + final linear
            const2d(bf),                               # final bias (1, O)
        ],
        out_specs=pl.BlockSpec((TB, O), lambda i: (i, 0)),
        compiler_params=pltpu.CompilerParams(
            dimension_semantics=("parallel",)),
    )(x_p, w_fused, m_sum, g_sum, r_exp, wf_fold, bf)
    return y if B_pad == B else y[:B]


def pack_params(wq_heads, wk_heads, wv_heads, wf_t, bf, *, num_heads, depth):
    """Plain-JAX parameter packing (done once, outside the kernel)."""
    H, D = num_heads, depth
    F = H * D
    O = wf_t.shape[1]
    scale = 1.0 / math.sqrt(D)

    # Column-concatenated per-head projections: column h*D+d = head h, dim d.
    wq_cat = jnp.transpose(wq_heads, (2, 0, 1)).reshape(F, F)
    wk_cat = jnp.transpose(wk_heads, (2, 0, 1)).reshape(F, F)
    wv_cat = jnp.transpose(wv_heads, (2, 0, 1)).reshape(F, F)

    # Pair-expanded projections, column (i*H + j)*D + d:
    #   Wq -> query head i (1/sqrt(D) folded in), Wk / Wv -> key/value head j.
    wq_rep = jnp.broadcast_to((wq_cat * scale).reshape(F, H, 1, D),
                              (F, H, H, D)).reshape(F, H * H * D)
    wk_rep = jnp.tile(wk_cat, (1, H))
    wv_rep = jnp.tile(wv_cat, (1, H))
    w_fused = jnp.concatenate([wq_rep, wk_rep, wv_rep], axis=1)   # (F, 3*H*F)

    eye_hh = jnp.eye(H * H, dtype=jnp.float32)
    m_sum = jnp.repeat(eye_hh, D, axis=0)                 # (H*F, H*H): sum each D-block
    g_sum = jnp.kron(jnp.eye(H, dtype=jnp.float32),
                     jnp.ones((H, H), jnp.float32))       # (H*H, H*H): sum over j per i
    r_exp = jnp.repeat(eye_hh, D, axis=1)                 # (H*H, H*F): broadcast w over D

    # Final linear with the torch transpose(1,2) (head-major -> depth-major)
    # folded in as a row permutation, then expanded over (i, j) so the j-sum of
    # the attention output is absorbed by the last matmul.
    hd = jnp.arange(F)
    h_idx, d_idx = hd // D, hd % D
    wf_perm = wf_t[d_idx * H + h_idx, :]                  # (F, O), row h*D+d
    wf_fold = jnp.broadcast_to(wf_perm.reshape(H, 1, D, O),
                               (H, H, D, O)).reshape(H * H * D, O)
    return w_fused, m_sum, g_sum, r_exp, wf_fold, bf


def reference_jax(x, wq_heads, wk_heads, wv_heads, wf_t, bf, *, num_heads, depth):
    """Pure-JAX mirror of the PyTorch forward (correctness check)."""
    B = x.shape[0]
    H, D = num_heads, depth
    q = jnp.stack([x @ wq_heads[h].T for h in range(H)], axis=1)  # (B, H, D)
    k = jnp.stack([x @ wk_heads[h].T for h in range(H)], axis=1)
    v = jnp.stack([x @ wv_heads[h].T for h in range(H)], axis=1)
    scores = jnp.einsum('bid,bjd->bij', q, k) / math.sqrt(D)      # (B, H, H)
    w = jax.nn.softmax(scores, axis=-1)
    out = jnp.einsum('bij,bjd->bid', w, v)                        # (B, H, D)
    concat = jnp.transpose(out, (0, 2, 1)).reshape(B, -1)         # (B, D*H)
    return concat @ wf_t + bf                                     # (B, O)


if __name__ == "__main__":
    B = 256                    # tiled: grid=(2,) parallel steps (shards on v7x)
    feature_dim = 32
    num_heads = 4
    output_dim = 16
    depth = feature_dim // num_heads

    key = jax.random.PRNGKey(0)
    kx, kq, kk, kv, kw, kb = jax.random.split(key, 6)

    x = jax.random.normal(kx, (B, feature_dim), jnp.float32)

    # Per-head Linear weights, torch convention: (out=depth, in=feature_dim).
    init = 1.0 / math.sqrt(feature_dim)
    wq_heads = jax.random.uniform(kq, (num_heads, depth, feature_dim),
                                  jnp.float32, -init, init)
    wk_heads = jax.random.uniform(kk, (num_heads, depth, feature_dim),
                                  jnp.float32, -init, init)
    wv_heads = jax.random.uniform(kv, (num_heads, depth, feature_dim),
                                  jnp.float32, -init, init)
    # Final Linear: torch weight (O, F); store transposed (F, O).
    wf_t = jax.random.uniform(kw, (feature_dim, output_dim),
                              jnp.float32, -init, init)
    bf = jax.random.uniform(kb, (1, output_dim), jnp.float32, -init, init)

    params = pack_params(wq_heads, wk_heads, wv_heads, wf_t, bf,
                         num_heads=num_heads, depth=depth)

    y = mhsa_pallas(x, *params, tile_b=128)
    y = jax.block_until_ready(y)

    y_ref = reference_jax(x, wq_heads, wk_heads, wv_heads, wf_t, bf,
                          num_heads=num_heads, depth=depth)
    # Tolerance loosened slightly for pl.reciprocal(approx=True) in the softmax.
    np.testing.assert_allclose(np.asarray(y), np.asarray(y_ref),
                               rtol=2e-3, atol=2e-3)
    print("KERNEL_OK")
</pallas_src>

<mosaic_0001>
module attributes {stable_mosaic.version = 11 : i64} {
  func.func @mhsa_kernel(%arg0: i32, %arg1: memref<128x32xf32, #tpu.memory_space<vmem>>, %arg2: memref<32x384xf32, #tpu.memory_space<vmem>>, %arg3: memref<128x16xf32, #tpu.memory_space<vmem>>, %arg4: memref<16x16xf32, #tpu.memory_space<vmem>>, %arg5: memref<16x128xf32, #tpu.memory_space<vmem>>, %arg6: memref<128x16xf32, #tpu.memory_space<vmem>>, %arg7: memref<1x16xf32, #tpu.memory_space<vmem>>, %arg8: memref<128x16xf32, #tpu.memory_space<vmem>>) attributes {dimension_semantics = [#tpu.dimension_semantics<parallel>], iteration_bounds = array<i64: 2>, scalar_prefetch = 0 : i64, scratch_operands = 0 : i64, tpu.core_type = #tpu.core_type<tc>, window_params = [{transform_indices = @transform_0, window_bounds = array<i64: 128, 32>}, {pipeline_mode = #tpu.pipeline_mode<synchronous>, transform_indices = @transform_1, window_bounds = array<i64: 32, 384>}, {pipeline_mode = #tpu.pipeline_mode<synchronous>, transform_indices = @transform_2, window_bounds = array<i64: 128, 16>}, {pipeline_mode = #tpu.pipeline_mode<synchronous>, transform_indices = @transform_3, window_bounds = array<i64: 16, 16>}, {pipeline_mode = #tpu.pipeline_mode<synchronous>, transform_indices = @transform_4, window_bounds = array<i64: 16, 128>}, {pipeline_mode = #tpu.pipeline_mode<synchronous>, transform_indices = @transform_5, window_bounds = array<i64: 128, 16>}, {pipeline_mode = #tpu.pipeline_mode<synchronous>, transform_indices = @transform_6, window_bounds = array<i64: 1, 16>}, {transform_indices = @transform_7, window_bounds = array<i64: 128, 16>}]} {
    %c0 = arith.constant 0 : index
    %c0_0 = arith.constant 0 : index
    %0 = vector.load %arg1[%c0, %c0_0] : memref<128x32xf32, #tpu.memory_space<vmem>>, vector<128x32xf32>
    %c0_1 = arith.constant 0 : index
    %c0_2 = arith.constant 0 : index
    %1 = vector.load %arg2[%c0_1, %c0_2] : memref<32x384xf32, #tpu.memory_space<vmem>>, vector<32x384xf32>
    %cst = arith.constant dense<0.000000e+00> : vector<128x384xf32>
    %2 = tpu.matmul %0, %1, %cst {dimension_numbers = #tpu.dot_dimension_numbers<[1], [0], [0], [1], [0, 0, 1, 1], [], []>} : vector<128x32xf32>, vector<32x384xf32>, vector<128x384xf32> -> vector<128x384xf32>
    %3 = vector.extract_strided_slice %2 {offsets = [0, 0], sizes = [128, 128], strides = [1, 1]} : vector<128x384xf32> to vector<128x128xf32>
    %4 = vector.extract_strided_slice %2 {offsets = [0, 128], sizes = [128, 128], strides = [1, 1]} : vector<128x384xf32> to vector<128x128xf32>
    %5 = vector.extract_strided_slice %2 {offsets = [0, 256], sizes = [128, 128], strides = [1, 1]} : vector<128x384xf32> to vector<128x128xf32>
    %6 = arith.mulf %3, %4 : vector<128x128xf32>
    %c0_3 = arith.constant 0 : index
    %c0_4 = arith.constant 0 : index
    %7 = vector.load %arg3[%c0_3, %c0_4] : memref<128x16xf32, #tpu.memory_space<vmem>>, vector<128x16xf32>
    %cst_5 = arith.constant dense<0.000000e+00> : vector<128x16xf32>
    %8 = tpu.matmul %6, %7, %cst_5 {dimension_numbers = #tpu.dot_dimension_numbers<[1], [0], [0], [1], [0, 0, 1, 1], [], []>} : vector<128x128xf32>, vector<128x16xf32>, vector<128x16xf32> -> vector<128x16xf32>
    %cst_6 = arith.constant dense<0xFF800000> : vector<128xf32>
    %9 = vector.multi_reduction <maximumf>, %8, %cst_6 [1] : vector<128x16xf32> to vector<128xf32>
    %10 = vector.shape_cast %9 : vector<128xf32> to vector<128x1xf32>
    %11 = vector.broadcast %10 : vector<128x1xf32> to vector<128x16xf32>
    %12 = arith.subf %8, %11 : vector<128x16xf32>
    %13 = math.exp %12 : vector<128x16xf32>
    %c0_7 = arith.constant 0 : index
    %c0_8 = arith.constant 0 : index
    %14 = vector.load %arg4[%c0_7, %c0_8] : memref<16x16xf32, #tpu.memory_space<vmem>>, vector<16x16xf32>
    %cst_9 = arith.constant dense<0.000000e+00> : vector<128x16xf32>
    %15 = tpu.matmul %13, %14, %cst_9 {dimension_numbers = #tpu.dot_dimension_numbers<[1], [0], [0], [1], [0, 0, 1, 1], [], []>} : vector<128x16xf32>, vector<16x16xf32>, vector<128x16xf32> -> vector<128x16xf32>
    %16 = tpu.reciprocal %15 {approx = true} : vector<128x16xf32> -> vector<128x16xf32>
    %17 = arith.mulf %13, %16 : vector<128x16xf32>
    %c0_10 = arith.constant 0 : index
    %c0_11 = arith.constant 0 : index
    %18 = vector.load %arg5[%c0_10, %c0_11] : memref<16x128xf32, #tpu.memory_space<vmem>>, vector<16x128xf32>
    %cst_12 = arith.constant dense<0.000000e+00> : vector<128x128xf32>
    %19 = tpu.matmul %17, %18, %cst_12 {dimension_numbers = #tpu.dot_dimension_numbers<[1], [0], [0], [1], [0, 0, 1, 1], [], []>} : vector<128x16xf32>, vector<16x128xf32>, vector<128x128xf32> -> vector<128x128xf32>
    %20 = arith.mulf %19, %5 : vector<128x128xf32>
    %c0_13 = arith.constant 0 : index
    %c0_14 = arith.constant 0 : index
    %21 = vector.load %arg6[%c0_13, %c0_14] : memref<128x16xf32, #tpu.memory_space<vmem>>, vector<128x16xf32>
    %cst_15 = arith.constant dense<0.000000e+00> : vector<128x16xf32>
    %22 = tpu.matmul %20, %21, %cst_15 {dimension_numbers = #tpu.dot_dimension_numbers<[1], [0], [0], [1], [0, 0, 1, 1], [], []>} : vector<128x128xf32>, vector<128x16xf32>, vector<128x16xf32> -> vector<128x16xf32>
    %c0_16 = arith.constant 0 : index
    %c0_17 = arith.constant 0 : index
    %23 = vector.load %arg7[%c0_16, %c0_17] : memref<1x16xf32, #tpu.memory_space<vmem>>, vector<1x16xf32>
    %24 = vector.broadcast %23 : vector<1x16xf32> to vector<128x16xf32>
    %25 = arith.addf %22, %24 : vector<128x16xf32>
    %c0_18 = arith.constant 0 : index
    %c0_19 = arith.constant 0 : index
    %26 = vector.load %arg8[%c0_18, %c0_19] : memref<128x16xf32, #tpu.memory_space<vmem>>, vector<128x16xf32>
    tpu.vector_store %arg8[%c0_18, %c0_19], %25 {strides = array<i32>} : memref<128x16xf32, #tpu.memory_space<vmem>>, vector<128x16xf32>,
    return
  }
  func.func @transform_0(%arg0: i32) -> (i32, i32) {
    %c0_i32 = arith.constant 0 : i32
    %c0_i32_0 = arith.constant 0 : i32
    return %arg0, %c0_i32 : i32, i32
  }
  func.func @transform_1(%arg0: i32) -> (i32, i32) {
    %c0_i32 = arith.constant 0 : i32
    %c0_i32_0 = arith.constant 0 : i32
    %c0_i32_1 = arith.constant 0 : i32
    return %c0_i32, %c0_i32_0 : i32, i32
  }
  func.func @transform_2(%arg0: i32) -> (i32, i32) {
    %c0_i32 = arith.constant 0 : i32
    %c0_i32_0 = arith.constant 0 : i32
    %c0_i32_1 = arith.constant 0 : i32
    return %c0_i32, %c0_i32_0 : i32, i32
  }
  func.func @transform_3(%arg0: i32) -> (i32, i32) {
    %c0_i32 = arith.constant 0 : i32
    %c0_i32_0 = arith.constant 0 : i32
    %c0_i32_1 = arith.constant 0 : i32
    return %c0_i32, %c0_i32_0 : i32, i32
  }
  func.func @transform_4(%arg0: i32) -> (i32, i32) {
    %c0_i32 = arith.constant 0 : i32
    %c0_i32_0 = arith.constant 0 : i32
    %c0_i32_1 = arith.constant 0 : i32
    return %c0_i32, %c0_i32_0 : i32, i32
  }
  func.func @transform_5(%arg0: i32) -> (i32, i32) {
    %c0_i32 = arith.constant 0 : i32
    %c0_i32_0 = arith.constant 0 : i32
    %c0_i32_1 = arith.constant 0 : i32
    return %c0_i32, %c0_i32_0 : i32, i32
  }
  func.func @transform_6(%arg0: i32) -> (i32, i32) {
    %c0_i32 = arith.constant 0 : i32
    %c0_i32_0 = arith.constant 0 : i32
    %c0_i32_1 = arith.constant 0 : i32
    return %c0_i32, %c0_i32_0 : i32, i32
  }
  func.func @transform_7(%arg0: i32) -> (i32, i32) {
    %c0_i32 = arith.constant 0 : i32
    %c0_i32_0 = arith.constant 0 : i32
    return %arg0, %c0_i32 : i32, i32
  }
}

</mosaic_0001>

<llo_original>
// kernel: tpu_custom_call.1
$region0: #{tpu_custom_call.1}
  #allocation0 [shape = 'u32[]', space=smem, size = 0x4, offset = 0x4, fixed_abs, tag = 'smem constant byte address 0x4 - core index']
  #allocation1 [shape = 'u32[144,128]{1,0:T(1,128)}', space=vmem, size = 0x12000, scoped, tag = 'internal scratch']
  %s0 = inlined_call_operand.vmem [shape: f32[256,32], index: 0, kind: input, shape index: {}]
  %s1 = inlined_call_operand.vmem [shape: f32[32,384], index: 1, kind: input, shape index: {}]
  %s2 = inlined_call_operand.vmem [shape: f32[128,16], index: 2, kind: input, shape index: {}]
  %s3 = inlined_call_operand.vmem [shape: f32[16,16], index: 3, kind: input, shape index: {}]
  %s4 = inlined_call_operand.vmem [shape: f32[16,128], index: 4, kind: input, shape index: {}]
  %s5 = inlined_call_operand.vmem [shape: f32[128,16], index: 5, kind: input, shape index: {}]
  %s6 = inlined_call_operand.vmem [shape: f32[1,16], index: 6, kind: input, shape index: {}]
  %s7 = inlined_call_operand.vmem [shape: f32[256,16], index: 7, kind: output, shape index: {}]
  %s8 = sld [smem:[#allocation0]]
  $region61: #{tpu_custom_call.1} parent=0
    _
  %s10 = ssub.s32 1, %s8
  %s11 = scalar_select 0, %s10, %s8
  loop: start=0, step=1, limit=4
  $region2: #{tpu_custom_call.1} parent=0 // loop_pre_header
    _
  $region3: #{tpu_custom_call.1} parent=0 // loop_header
    %s13 = sphi 0, %s17
    %p14 = scmp.ge.s32.totalorder %s13, 4
    %s23 = sphi 0, %s25
    %s26 = sphi 0, %s23
    %s27 = sphi 0, %s26
    %s43 = sphi 0, %s27
    %s47 = sphi 0, %s47
    %s49 = sphi 0, %s47
    %s50 = sphi 0, %s49
    %s64 = sphi 0, %s50
    %s68 = sphi 0, %s68
    %s70 = sphi 0, %s68
    %s71 = sphi 0, %s70
    %s85 = sphi 0, %s71
    %s89 = sphi 0, %s89
    %s91 = sphi 0, %s89
    %s92 = sphi 0, %s91
    %s106 = sphi 0, %s92
    %s110 = sphi 0, %s110
    %s112 = sphi 0, %s110
    %s113 = sphi 0, %s112
    %s127 = sphi 0, %s113
    %s131 = sphi 0, %s131
    %s133 = sphi 0, %s131
    %s134 = sphi 0, %s133
    %s148 = sphi 0, %s134
    %s152 = sphi 0, %s152
    %s154 = sphi 0, %s152
    %s155 = sphi 0, %s154
    %s169 = sphi 0, %s155
    %s175 = sphi 0, %s177
    %s178 = sphi 0, %s175
    %s179 = sphi 0, %s178
    %s195 = sphi 0, %s179
  $region4: #{tpu_custom_call.1} parent=0 // loop_header_branch
    %16 = sbr.rel (%p14) target = $region8
  $region5: #{tpu_custom_call.1} parent=0 // loop_body
    %s18 = ssub.s32 %s13, 1
    %s19 = ssub.s32 %s13, 2
    %s20 = sadd.s32 %s13, 1
    %s21 = ssub.s32 %s13, %s20
    %p22 = scmp.eq.s32.totalorder %s21, 0
    %s24 = sadd.s32 %s23, 1
    %s25 = scalar_select %p22, %s23, %s24
    %p28 = pneg %p22
    %p29 = scmp.eq.s32.totalorder %s13, 1
    %p30 = por %p28, %p29
    %p31 = scmp.ne.s32.totalorder %s23, %s26
    %p32 = scmp.eq.s32.totalorder %s13, 0
    %p33 = por %p31, %p32
    %p34 = scmp.ne.s32.totalorder %s23, %s26
    %p35 = scmp.eq.s32.totalorder %s18, 1
    %p36 = por %p34, %p35
    %p37 = scmp.ne.s32.totalorder %s26, %s27
    %p38 = scmp.eq.s32.totalorder %s18, 0
    %p39 = por %p37, %p38
    %p40 = scmp.ne.s32.totalorder %s26, %s27
    %p41 = scmp.eq.s32.totalorder %s19, 1
    %p42 = por %p40, %p41
    %p44 = scmp.ne.s32.totalorder %s27, %s43
    %p45 = scmp.eq.s32.totalorder %s19, 0
    %p46 = por %p44, %p45
    %s48 = sadd.s32 %s47, 1
    %p51 = scmp.eq.s32.totalorder %s13, 1
    %p52 = scmp.ne.s32.totalorder %s47, %s49
    %p53 = scmp.eq.s32.totalorder %s13, 0
    %p54 = por %p52, %p53
    %p55 = scmp.ne.s32.totalorder %s47, %s49
    %p56 = scmp.eq.s32.totalorder %s18, 1
    %p57 = por %p55, %p56
    %p58 = scmp.ne.s32.totalorder %s49, %s50
    %p59 = scmp.eq.s32.totalorder %s18, 0
    %p60 = por %p58, %p59
    %p61 = scmp.ne.s32.totalorder %s49, %s50
    %p62 = scmp.eq.s32.totalorder %s19, 1
    %p63 = por %p61, %p62
    %p65 = scmp.ne.s32.totalorder %s50, %s64
    %p66 = scmp.eq.s32.totalorder %s19, 0
    %p67 = por %p65, %p66
    %s69 = sadd.s32 %s68, 1
    %p72 = scmp.eq.s32.totalorder %s13, 1
    %p73 = scmp.ne.s32.totalorder %s68, %s70
    %p74 = scmp.eq.s32.totalorder %s13, 0
    %p75 = por %p73, %p74
    %p76 = scmp.ne.s32.totalorder %s68, %s70
    %p77 = scmp.eq.s32.totalorder %s18, 1
    %p78 = por %p76, %p77
    %p79 = scmp.ne.s32.totalorder %s70, %s71
    %p80 = scmp.eq.s32.totalorder %s18, 0
    %p81 = por %p79, %p80
    %p82 = scmp.ne.s32.totalorder %s70, %s71
    %p83 = scmp.eq.s32.totalorder %s19, 1
    %p84 = por %p82, %p83
    %p86 = scmp.ne.s32.totalorder %s71, %s85
    %p87 = scmp.eq.s32.totalorder %s19, 0
    %p88 = por %p86, %p87
    %s90 = sadd.s32 %s89, 1
    %p93 = scmp.eq.s32.totalorder %s13, 1
    %p94 = scmp.ne.s32.totalorder %s89, %s91
    %p95 = scmp.eq.s32.totalorder %s13, 0
    %p96 = por %p94, %p95
    %p97 = scmp.ne.s32.totalorder %s89, %s91
    %p98 = scmp.eq.s32.totalorder %s18, 1
    %p99 = por %p97, %p98
    %p100 = scmp.ne.s32.totalorder %s91, %s92
    %p101 = scmp.eq.s32.totalorder %s18, 0
    %p102 = por %p100, %p101
    %p103 = scmp.ne.s32.totalorder %s91, %s92
    %p104 = scmp.eq.s32.totalorder %s19, 1
    %p105 = por %p103, %p104
    %p107 = scmp.ne.s32.totalorder %s92, %s106
    %p108 = scmp.eq.s32.totalorder %s19, 0
    %p109 = por %p107, %p108
    %s111 = sadd.s32 %s110, 1
    %p114 = scmp.eq.s32.totalorder %s13, 1
    %p115 = scmp.ne.s32.totalorder %s110, %s112
    %p116 = scmp.eq.s32.totalorder %s13, 0
    %p117 = por %p115, %p116
    %p118 = scmp.ne.s32.totalorder %s110, %s112
    %p119 = scmp.eq.s32.totalorder %s18, 1
    %p120 = por %p118, %p119
    %p121 = scmp.ne.s32.totalorder %s112, %s113
    %p122 = scmp.eq.s32.totalorder %s18, 0
    %p123 = por %p121, %p122
    %p124 = scmp.ne.s32.totalorder %s112, %s113
    %p125 = scmp.eq.s32.totalorder %s19, 1
    %p126 = por %p124, %p125
    %p128 = scmp.ne.s32.totalorder %s113, %s127
    %p129 = scmp.eq.s32.totalorder %s19, 0
    %p130 = por %p128, %p129
    %s132 = sadd.s32 %s131, 1
    %p135 = scmp.eq.s32.totalorder %s13, 1
    %p136 = scmp.ne.s32.totalorder %s131, %s133
    %p137 = scmp.eq.s32.totalorder %s13, 0
    %p138 = por %p136, %p137
    %p139 = scmp.ne.s32.totalorder %s131, %s133
    %p140 = scmp.eq.s32.totalorder %s18, 1
    %p141 = por %p139, %p140
    %p142 = scmp.ne.s32.totalorder %s133, %s134
    %p143 = scmp.eq.s32.totalorder %s18, 0
    %p144 = por %p142, %p143
    %p145 = scmp.ne.s32.totalorder %s133, %s134
    %p146 = scmp.eq.s32.totalorder %s19, 1
    %p147 = por %p145, %p146
    %p149 = scmp.ne.s32.totalorder %s134, %s148
    %p150 = scmp.eq.s32.totalorder %s19, 0
    %p151 = por %p149, %p150
    %s153 = sadd.s32 %s152, 1
    %p156 = scmp.eq.s32.totalorder %s13, 1
    %p157 = scmp.ne.s32.totalorder %s152, %s154
    %p158 = scmp.eq.s32.totalorder %s13, 0
    %p159 = por %p157, %p158
    %p160 = scmp.ne.s32.totalorder %s152, %s154
    %p161 = scmp.eq.s32.totalorder %s18, 1
    %p162 = por %p160, %p161
    %p163 = scmp.ne.s32.totalorder %s154, %s155
    %p164 = scmp.eq.s32.totalorder %s18, 0
    %p165 = por %p163, %p164
    %p166 = scmp.ne.s32.totalorder %s154, %s155
    %p167 = scmp.eq.s32.totalorder %s19, 1
    %p168 = por %p166, %p167
    %p170 = scmp.ne.s32.totalorder %s155, %s169
    %p171 = scmp.eq.s32.totalorder %s19, 0
    %p172 = por %p170, %p171
    %s173 = ssub.s32 %s13, %s20
    %p174 = scmp.eq.s32.totalorder %s173, 0
    %s176 = sadd.s32 %s175, 1
    %s177 = scalar_select %p174, %s175, %s176
    %p180 = pneg %p174
    %p181 = scmp.eq.s32.totalorder %s13, 1
    %p182 = por %p180, %p181
    %p183 = scmp.ne.s32.totalorder %s175, %s178
    %p184 = scmp.eq.s32.totalorder %s13, 0
    %p185 = por %p183, %p184
    %p186 = scmp.ne.s32.totalorder %s175, %s178
    %p187 = scmp.eq.s32.totalorder %s18, 1
    %p188 = por %p186, %p187
    %p189 = scmp.ne.s32.totalorder %s178, %s179
    %p190 = scmp.eq.s32.totalorder %s18, 0
    %p191 = por %p189, %p190
    %p192 = scmp.ne.s32.totalorder %s178, %s179
    %p193 = scmp.eq.s32.totalorder %s19, 1
    %p194 = por %p192, %p193
    %p196 = scmp.ne.s32.totalorder %s179, %s195
    %p197 = scmp.eq.s32.totalorder %s19, 0
    %p198 = por %p196, %p197
    %p199 = scmp.le.s32.totalorder 1, %s13
    %p200 = scmp.lt.s32.totalorder %s13, 3
    %p201 = pnand %p199, %p200
    %p202 = pneg %p201
    // Predicated region
    $region9: #{tpu_custom_call.1} parent=5 // pred_check
      _
    $region10: #{tpu_custom_call.1} parent=5 // pred_check_branch
      %204 = sbr.rel (%p201) target = $region12
    $region11: #{tpu_custom_call.1} parent=5 // pred_region
      %s205 = ssub.s32 %s13, 1
      // Predicated region
      $region13: #{tpu_custom_call.1} parent=11 // pred_check
        %p206 = pneg %p60
      $region14: #{tpu_custom_call.1} parent=11 // pred_check_branch
        %208 = sbr.rel (%p206) target = $region16
      $region15: #{tpu_custom_call.1} parent=11 // pred_region
        _
      $region16: #{tpu_custom_call.1} parent=11 // pred_fallthru
        _
      // Predicated region
      $region17: #{tpu_custom_call.1} parent=11 // pred_check
        %p209 = pneg %p81
      $region18: #{tpu_custom_call.1} parent=11 // pred_check_branch
        %211 = sbr.rel (%p209) target = $region20
      $region19: #{tpu_custom_call.1} parent=11 // pred_region
        _
      $region20: #{tpu_custom_call.1} parent=11 // pred_fallthru
        _
      // Predicated region
      $region21: #{tpu_custom_call.1} parent=11 // pred_check
        %p212 = pneg %p102
      $region22: #{tpu_custom_call.1} parent=11 // pred_check_branch
        %214 = sbr.rel (%p212) target = $region24
      $region23: #{tpu_custom_call.1} parent=11 // pred_region
        _
      $region24: #{tpu_custom_call.1} parent=11 // pred_fallthru
        _
      // Predicated region
      $region25: #{tpu_custom_call.1} parent=11 // pred_check
        %p215 = pneg %p123
      $region26: #{tpu_custom_call.1} parent=11 // pred_check_branch
        %217 = sbr.rel (%p215) target = $region28
      $region27: #{tpu_custom_call.1} parent=11 // pred_region
        _
      $region28: #{tpu_custom_call.1} parent=11 // pred_fallthru
        _
      // Predicated region
      $region29: #{tpu_custom_call.1} parent=11 // pred_check
        %p218 = pneg %p144
      $region30: #{tpu_custom_call.1} parent=11 // pred_check_branch
        %220 = sbr.rel (%p218) target = $region32
      $region31: #{tpu_custom_call.1} parent=11 // pred_region
        _
      $region32: #{tpu_custom_call.1} parent=11 // pred_fallthru
        _
      // Predicated region
      $region33: #{tpu_custom_call.1} parent=11 // pred_check
        %p221 = pneg %p165
      $region34: #{tpu_custom_call.1} parent=11 // pred_check_branch
        %223 = sbr.rel (%p221) target = $region36
      $region35: #{tpu_custom_call.1} parent=11 // pred_region
        _
      $region36: #{tpu_custom_call.1} parent=11 // pred_fallthru
        _
    $region12: #{tpu_custom_call.1} parent=5 // pred_fallthru
      _
    %p224 = scmp.lt.s32.totalorder %s13, 2
    // Predicated region
    $region37: #{tpu_custom_call.1} parent=5 // pred_check
      %p225 = pneg %p224
    $region38: #{tpu_custom_call.1} parent=5 // pred_check_branch
      %227 = sbr.rel (%p225) target = $region40
    $region39: #{tpu_custom_call.1} parent=5 // pred_region
      // Predicated region
      $region41: #{tpu_custom_call.1} parent=39 // pred_check
        %p228 = pneg %p33
      $region42: #{tpu_custom_call.1} parent=39 // pred_check_branch
        %230 = sbr.rel (%p228) target = $region44
      $region43: #{tpu_custom_call.1} parent=39 // pred_region
        %s231 = smul.u32 16, %s13
        %p232 = scmp.lt.s32.totalorder %s231, 31
        %s233 = scalar_select %p232, %s231, 31
        %s234 = smul.addr %s233, 8
        %s235 = scalar_lea.vmem %s0, %s234
        %s236 = smul.u32 16, %s13
      $region44: #{tpu_custom_call.1} parent=39 // pred_fallthru
        _
    $region40: #{tpu_custom_call.1} parent=5 // pred_fallthru
      _
    %p237 = scmp.le.s32.totalorder 1, %s13
    %p238 = scmp.lt.s32.totalorder %s13, 3
    %p239 = pnand %p237, %p238
    %p240 = pneg %p239
    // Predicated region
    $region45: #{tpu_custom_call.1} parent=5 // pred_check
      _
    $region46: #{tpu_custom_call.1} parent=5 // pred_check_branch
      %242 = sbr.rel (%p239) target = $region48
    $region47: #{tpu_custom_call.1} parent=5 // pred_region
      %s243 = ssub.s32 %s13, 1
      %s244 = smul.u32 16, %s18
      %p245 = scmp.lt.s32.totalorder %s244, 31
      %s246 = scalar_select %p245, %s244, 31
      %s247 = smul.addr %s246, 8
      %s248 = scalar_lea.vmem %s0, %s247
      %p249 = pneg %p39
      %p250 = pneg %p36
      %p251 = pneg %p60
      %p252 = pneg %p57
      %p253 = pneg %p81
      %p254 = pneg %p78
      %p255 = pneg %p102
      %p256 = pneg %p99
      %p257 = pneg %p123
      %p258 = pneg %p120
      %p259 = pneg %p144
      %p260 = pneg %p141
      %p261 = pneg %p165
      %p262 = pneg %p162
      %p263 = pneg %p191
      %p264 = pneg %p188
      %s265 = smul.u32 16, %s18
      %p266 = scmp.lt.s32.totalorder %s265, 31
      %s267 = scalar_select %p266, %s265, 31
      %s268 = smul.addr %s267, 8
      %s269 = scalar_lea.vmem %s7, %s268
      %s270 = smul.u32 16, %s18
      %p271 = scmp.lt.s32.totalorder %s270, 31
      %s272 = scalar_select %p271, %s270, 31
      %s273 = smul.addr %s272, 8
      %s274 = scalar_lea.vmem %s0, %s273
      %s275 = smul.u32 16, %s18
      %s276 = smul.u32 16, %s18
      %p277 = scmp.lt.s32.totalorder %s276, 31
      %s278 = scalar_select %p277, %s276, 31
      %s279 = smul.addr %s278, 8
      %s280 = scalar_lea.vmem %s7, %s279
      %s281 = smul.u32 16, %s18
      %v282 = vld [vmem:[%s274] sm:$0xff]
      %v283 = vld [vmem:[%s274 + $0x8] sm:$0xff]
      %v284 = vld [vmem:[%s274 + $0x10] sm:$0xff]
      %v285 = vld [vmem:[%s274 + $0x18] sm:$0xff]
      %v286 = vld [vmem:[%s274 + $0x20] sm:$0xff]
      %v287 = vld [vmem:[%s274 + $0x28] sm:$0xff]
      %v288 = vld [vmem:[%s274 + $0x30] sm:$0xff]
      %v289 = vld [vmem:[%s274 + $0x38] sm:$0xff]
      %v290 = vld [vmem:[%s274 + $0x40] sm:$0xff]
      %v291 = vld [vmem:[%s274 + $0x48] sm:$0xff]
      %v292 = vld [vmem:[%s274 + $0x50] sm:$0xff]
      %v293 = vld [vmem:[%s274 + $0x58] sm:$0xff]
      %v294 = vld [vmem:[%s274 + $0x60] sm:$0xff]
      %v295 = vld [vmem:[%s274 + $0x68] sm:$0xff]
      %v296 = vld [vmem:[%s274 + $0x70] sm:$0xff]
      %v297 = vld [vmem:[%s274 + $0x78] sm:$0xff]
      %v298 = vld [vmem:[%s1] sm:$0xff]
      %v299 = vld [vmem:[%s1 + $0x8] sm:$0xff]
      %v300 = vld [vmem:[%s1 + $0x10] sm:$0xff]
      %v301 = vld [vmem:[%s1 + $0x18] sm:$0xff]
      %v302 = vld [vmem:[%s1 + $0x20] sm:$0xff]
      %v303 = vld [vmem:[%s1 + $0x28] sm:$0xff]
      %v304 = vld [vmem:[%s1 + $0x30] sm:$0xff]
      %v305 = vld [vmem:[%s1 + $0x38] sm:$0xff]
      %v306 = vld [vmem:[%s1 + $0x40] sm:$0xff]
      %v307 = vld [vmem:[%s1 + $0x48] sm:$0xff]
      %v308 = vld [vmem:[%s1 + $0x50] sm:$0xff]
      %v309 = vld [vmem:[%s1 + $0x58] sm:$0xff]
      %vm310 = vcmask 261120
      %v312 = vsel %vm310, %v282, 0
      %v315 = vsel %vm310, %v283, 0
      %v318 = vsel %vm310, %v284, 0
      %v321 = vsel %vm310, %v285, 0
      %v324 = vsel %vm310, %v286, 0
      %v327 = vsel %vm310, %v287, 0
      %v330 = vsel %vm310, %v288, 0
      %v333 = vsel %vm310, %v289, 0
      %v336 = vsel %vm310, %v290, 0
      %v339 = vsel %vm310, %v291, 0
      %v342 = vsel %vm310, %v292, 0
      %v345 = vsel %vm310, %v293, 0
      %v348 = vsel %vm310, %v294, 0
      %v351 = vsel %vm310, %v295, 0
      %v354 = vsel %vm310, %v296, 0
      %v357 = vsel %vm310, %v297, 0
      %359 = vmatprep.subr.mxu0 0.0
      %360 = vmatpush1.msra.mxu0 0.0
      %361 = vmatprep.subr.mxu0 0.0
      %362 = vmatpush1.msra.mxu0 0.0
      %363 = vmatprep.subr.mxu0 0.0
      %364 = vmatpush1.msra.mxu0 0.0
      %365 = vmatprep.subr.mxu0 0.0
      %366 = vmatpush1.msra.mxu0 0.0
      %367 = vmatprep.subr.mxu0 0.0
      %368 = vmatpush1.msra.mxu0 0.0
      %369 = vmatprep.subr.mxu0 0.0
      %370 = vmatpush1.msra.mxu0 0.0
      %371 = vmatprep.subr.mxu0 0.0
      %372 = vmatpush1.msra.mxu0 0.0
      %373 = vmatprep.subr.mxu0 0.0
      %374 = vmatpush1.msra.mxu0 0.0
      %375 = vmatprep.subr.mxu0 0.0
      %376 = vmatpush1.msra.mxu0 0.0
      %377 = vmatprep.subr.mxu0 0.0
      %378 = vmatpush1.msra.mxu0 0.0
      %379 = vmatprep.subr.mxu0 0.0
      %380 = vmatpush1.msra.mxu0 0.0
      %381 = vmatprep.subr.mxu0 0.0
      %382 = vmatpush1.msra.mxu0 0.0
      %383 = vmatprep.subr.mxu0 %v308
      %384 = vmatpush1.msra.mxu0 %v307
      %385 = vmatprep.subr.mxu0 %v305
      %386 = vmatpush1.msra.mxu0 %v304
      %387 = vmatprep.subr.mxu0 %v302
      %388 = vmatpush1.msra.mxu0 %v301
      %389 = vmatprep.subr.mxu0 %v299
      %390 = vmatpush1.msra.mxu0 %v298
      %391 = vmatprep.subr.mxu0 0.0
      %392 = vmatpush2.msra.mxu0 0.0
      %393 = vmatprep.subr.mxu0 0.0
      %394 = vmatpush2.msra.mxu0 0.0
      %395 = vmatprep.subr.mxu0 0.0
      %396 = vmatpush2.msra.mxu0 0.0
      %397 = vmatprep.subr.mxu0 0.0
      %398 = vmatpush2.msra.mxu0 0.0
      %399 = vmatprep.subr.mxu0 0.0
      %400 = vmatpush2.msra.mxu0 0.0
      %401 = vmatprep.subr.mxu0 0.0
      %402 = vmatpush2.msra.mxu0 0.0
      %403 = vmatprep.subr.mxu0 0.0
      %404 = vmatpush2.msra.mxu0 0.0
      %405 = vmatprep.subr.mxu0 0.0
      %406 = vmatpush2.msra.mxu0 0.0
      %407 = vmatprep.subr.mxu0 0.0
      %408 = vmatpush2.msra.mxu0 0.0
      %409 = vmatprep.subr.mxu0 0.0
      %410 = vmatpush2.msra.mxu0 0.0
      %411 = vmatprep.subr.mxu0 0.0
      %412 = vmatpush2.msra.mxu0 0.0
      %413 = vmatprep.subr.mxu0 0.0
      %414 = vmatpush2.msra.mxu0 0.0
      %415 = vmatprep.subr.mxu0 0.0
      %416 = vmatpush2.msra.mxu0 0.0
      %417 = vmatprep.subr.mxu0 0.0
      %418 = vmatpush2.msra.mxu0 0.0
      %419 = vmatprep.subr.mxu0 0.0
      %420 = vmatpush2.msra.mxu0 0.0
      %421 = vmatprep.subr.mxu0 0.0
      %422 = vmatpush2.msra.mxu0 0.0
      %423 = vmatprep.mubr.f32.mxu0 0.0
      %424 = vmatmul.mubr.f32.gmra.mxu0 %v312
      %v425 = vpop.f32.mrf.mxu0
      %v426 = vadd.f32 0.0, %v425
      %v427 = vpop.f32.mrf.mxu0
      %v428 = vadd.f32 0.0, %v427
      %429 = vmatprep.mubr.f32.mxu0 0.0
      %430 = vmatmul.mubr.f32.gmra.mxu0 %v315
      %v431 = vpop.f32.mrf.mxu0
      %v432 = vadd.f32 0.0, %v431
      %v433 = vpop.f32.mrf.mxu0
      %v434 = vadd.f32 0.0, %v433
      %435 = vmatprep.mubr.f32.mxu0 0.0
      %436 = vmatmul.mubr.f32.gmra.mxu0 %v318
      %v437 = vpop.f32.mrf.mxu0
      %v438 = vadd.f32 0.0, %v437
      %v439 = vpop.f32.mrf.mxu0
      %v440 = vadd.f32 0.0, %v439
      %441 = vmatprep.mubr.f32.mxu0 0.0
      %442 = vmatmul.mubr.f32.gmra.mxu0 %v321
      %v443 = vpop.f32.mrf.mxu0
      %v444 = vadd.f32 0.0, %v443
      %v445 = vpop.f32.mrf.mxu0
      %v446 = vadd.f32 0.0, %v445
      %447 = vmatprep.mubr.f32.mxu0 0.0
      %448 = vmatmul.mubr.f32.gmra.mxu0 %v324
      %v449 = vpop.f32.mrf.mxu0
      %v450 = vadd.f32 0.0, %v449
      %v451 = vpop.f32.mrf.mxu0
      %v452 = vadd.f32 0.0, %v451
      %453 = vmatprep.mubr.f32.mxu0 0.0
      %454 = vmatmul.mubr.f32.gmra.mxu0 %v327
      %v455 = vpop.f32.mrf.mxu0
      %v456 = vadd.f32 0.0, %v455
      %v457 = vpop.f32.mrf.mxu0
      %v458 = vadd.f32 0.0, %v457
      %459 = vmatprep.mubr.f32.mxu0 0.0
      %460 = vmatmul.mubr.f32.gmra.mxu0 %v330
      %v461 = vpop.f32.mrf.mxu0
      %v462 = vadd.f32 0.0, %v461
      %v463 = vpop.f32.mrf.mxu0
      %v464 = vadd.f32 0.0, %v463
      %465 = vmatprep.mubr.f32.mxu0 0.0
      %466 = vmatmul.mubr.f32.gmra.mxu0 %v333
      %v467 = vpop.f32.mrf.mxu0
      %v468 = vadd.f32 0.0, %v467
      %v469 = vpop.f32.mrf.mxu0
      %v470 = vadd.f32 0.0, %v469
      %471 = vmatprep.mubr.f32.mxu0 0.0
      %472 = vmatmul.mubr.f32.gmra.mxu0 %v336
      %v473 = vpop.f32.mrf.mxu0
      %v474 = vadd.f32 0.0, %v473
      %v475 = vpop.f32.mrf.mxu0
      %v476 = vadd.f32 0.0, %v475
      %477 = vmatprep.mubr.f32.mxu0 0.0
      %478 = vmatmul.mubr.f32.gmra.mxu0 %v339
      %v479 = vpop.f32.mrf.mxu0
      %v480 = vadd.f32 0.0, %v479
      %v481 = vpop.f32.mrf.mxu0
      %v482 = vadd.f32 0.0, %v481
      %483 = vmatprep.mubr.f32.mxu0 0.0
      %484 = vmatmul.mubr.f32.gmra.mxu0 %v342
      %v485 = vpop.f32.mrf.mxu0
      %v486 = vadd.f32 0.0, %v485
      %v487 = vpop.f32.mrf.mxu0
      %v488 = vadd.f32 0.0, %v487
      %489 = vmatprep.mubr.f32.mxu0 0.0
      %490 = vmatmul.mubr.f32.gmra.mxu0 %v345
      %v491 = vpop.f32.mrf.mxu0
      %v492 = vadd.f32 0.0, %v491
      %v493 = vpop.f32.mrf.mxu0
      %v494 = vadd.f32 0.0, %v493
      %495 = vmatprep.mubr.f32.mxu0 0.0
      %496 = vmatmul.mubr.f32.gmra.mxu0 %v348
      %v497 = vpop.f32.mrf.mxu0
      %v498 = vadd.f32 0.0, %v497
      %v499 = vpop.f32.mrf.mxu0
      %v500 = vadd.f32 0.0, %v499
      %501 = vmatprep.mubr.f32.mxu0 0.0
      %502 = vmatmul.mubr.f32.gmra.mxu0 %v351
      %v503 = vpop.f32.mrf.mxu0
      %v504 = vadd.f32 0.0, %v503
      %v505 = vpop.f32.mrf.mxu0
      %v506 = vadd.f32 0.0, %v505
      %507 = vmatprep.mubr.f32.mxu0 0.0
      %508 = vmatmul.mubr.f32.gmra.mxu0 %v354
      %v509 = vpop.f32.mrf.mxu0
      %v510 = vadd.f32 0.0, %v509
      %v511 = vpop.f32.mrf.mxu0
      %v512 = vadd.f32 0.0, %v511
      %513 = vmatprep.mubr.f32.mxu0 0.0
      %514 = vmatmul.mubr.f32.gmra.mxu0 %v357
      %v515 = vpop.f32.mrf.mxu0
      %v516 = vadd.f32 0.0, %v515
      %v517 = vpop.f32.mrf.mxu0
      %v518 = vadd.f32 0.0, %v517
      %519 = vdwg.mxu0
      %520 = vmatprep.subr.mxu0 0.0
      %521 = vmatpush1.msra.mxu0 0.0
      %522 = vmatprep.subr.mxu0 0.0
      %523 = vmatpush1.msra.mxu0 0.0
      %524 = vmatprep.subr.mxu0 0.0
      %525 = vmatpush1.msra.mxu0 0.0
      %526 = vmatprep.subr.mxu0 0.0
      %527 = vmatpush1.msra.mxu0 0.0
      %528 = vmatprep.subr.mxu0 0.0
      %529 = vmatpush1.msra.mxu0 0.0
      %530 = vmatprep.subr.mxu0 0.0
      %531 = vmatpush1.msra.mxu0 0.0
      %532 = vmatprep.subr.mxu0 0.0
      %533 = vmatpush1.msra.mxu0 0.0
      %534 = vmatprep.subr.mxu0 0.0
      %535 = vmatpush1.msra.mxu0 0.0
      %536 = vmatprep.subr.mxu0 0.0
      %537 = vmatpush1.msra.mxu0 0.0
      %538 = vmatprep.subr.mxu0 0.0
      %539 = vmatpush1.msra.mxu0 0.0
      %540 = vmatprep.subr.mxu0 0.0
      %541 = vmatpush1.msra.mxu0 0.0
      %542 = vmatprep.subr.mxu0 0.0
      %543 = vmatpush1.msra.mxu0 0.0
      %544 = vmatprep.subr.mxu0 0.0
      %545 = vmatpush1.msra.mxu0 %v309
      %546 = vmatprep.subr.mxu0 0.0
      %547 = vmatpush1.msra.mxu0 %v306
      %548 = vmatprep.subr.mxu0 0.0
      %549 = vmatpush1.msra.mxu0 %v303
      %550 = vmatprep.subr.mxu0 0.0
      %551 = vmatpush1.msra.mxu0 %v300
      %552 = vmatprep.subr.mxu0 0.0
      %553 = vmatpush2.msra.mxu0 0.0
      %554 = vmatprep.subr.mxu0 0.0
      %555 = vmatpush2.msra.mxu0 0.0
      %556 = vmatprep.subr.mxu0 0.0
      %557 = vmatpush2.msra.mxu0 0.0
      %558 = vmatprep.subr.mxu0 0.0
      %559 = vmatpush2.msra.mxu0 0.0
      %560 = vmatprep.subr.mxu0 0.0
      %561 = vmatpush2.msra.mxu0 0.0
      %562 = vmatprep.subr.mxu0 0.0
      %563 = vmatpush2.msra.mxu0 0.0
      %564 = vmatprep.subr.mxu0 0.0
      %565 = vmatpush2.msra.mxu0 0.0
      %566 = vmatprep.subr.mxu0 0.0
      %567 = vmatpush2.msra.mxu0 0.0
      %568 = vmatprep.subr.mxu0 0.0
      %569 = vmatpush2.msra.mxu0 0.0
      %570 = vmatprep.subr.mxu0 0.0
      %571 = vmatpush2.msra.mxu0 0.0
      %572 = vmatprep.subr.mxu0 0.0
      %573 = vmatpush2.msra.mxu0 0.0
      %574 = vmatprep.subr.mxu0 0.0
      %575 = vmatpush2.msra.mxu0 0.0
      %576 = vmatprep.subr.mxu0 0.0
      %577 = vmatpush2.msra.mxu0 0.0
      %578 = vmatprep.subr.mxu0 0.0
      %579 = vmatpush2.msra.mxu0 0.0
      %580 = vmatprep.subr.mxu0 0.0
      %581 = vmatpush2.msra.mxu0 0.0
      %582 = vmatprep.subr.mxu0 0.0
      %583 = vmatpush2.msra.mxu0 0.0
      %584 = vmatprep.mubr.f32.mxu0 0.0
      %585 = vmatmul.mubr.f32.gmra.mxu0 %v312
      %v586 = vpop.f32.mrf.mxu0
      %v587 = vadd.f32 0.0, %v586
      %v588 = vpop.f32.mrf.mxu0
      %589 = vmatprep.mubr.f32.mxu0 0.0
      %590 = vmatmul.mubr.f32.gmra.mxu0 %v315
      %v591 = vpop.f32.mrf.mxu0
      %v592 = vadd.f32 0.0, %v591
      %v593 = vpop.f32.mrf.mxu0
      %594 = vmatprep.mubr.f32.mxu0 0.0
      %595 = vmatmul.mubr.f32.gmra.mxu0 %v318
      %v596 = vpop.f32.mrf.mxu0
      %v597 = vadd.f32 0.0, %v596
      %v598 = vpop.f32.mrf.mxu0
      %599 = vmatprep.mubr.f32.mxu0 0.0
      %600 = vmatmul.mubr.f32.gmra.mxu0 %v321
      %v601 = vpop.f32.mrf.mxu0
      %v602 = vadd.f32 0.0, %v601
      %v603 = vpop.f32.mrf.mxu0
      %604 = vmatprep.mubr.f32.mxu0 0.0
      %605 = vmatmul.mubr.f32.gmra.mxu0 %v324
      %v606 = vpop.f32.mrf.mxu0
      %v607 = vadd.f32 0.0, %v606
      %v608 = vpop.f32.mrf.mxu0
      %609 = vmatprep.mubr.f32.mxu0 0.0
      %610 = vmatmul.mubr.f32.gmra.mxu0 %v327
      %v611 = vpop.f32.mrf.mxu0
      %v612 = vadd.f32 0.0, %v611
      %v613 = vpop.f32.mrf.mxu0
      %614 = vmatprep.mubr.f32.mxu0 0.0
      %615 = vmatmul.mubr.f32.gmra.mxu0 %v330
      %v616 = vpop.f32.mrf.mxu0
      %v617 = vadd.f32 0.0, %v616
      %v618 = vpop.f32.mrf.mxu0
      %619 = vmatprep.mubr.f32.mxu0 0.0
      %620 = vmatmul.mubr.f32.gmra.mxu0 %v333
      %v621 = vpop.f32.mrf.mxu0
      %v622 = vadd.f32 0.0, %v621
      %v623 = vpop.f32.mrf.mxu0
      %624 = vmatprep.mubr.f32.mxu0 0.0
      %625 = vmatmul.mubr.f32.gmra.mxu0 %v336
      %v626 = vpop.f32.mrf.mxu0
      %v627 = vadd.f32 0.0, %v626
      %v628 = vpop.f32.mrf.mxu0
      %629 = vmatprep.mubr.f32.mxu0 0.0
      %630 = vmatmul.mubr.f32.gmra.mxu0 %v339
      %v631 = vpop.f32.mrf.mxu0
      %v632 = vadd.f32 0.0, %v631
      %v633 = vpop.f32.mrf.mxu0
      %634 = vmatprep.mubr.f32.mxu0 0.0
      %635 = vmatmul.mubr.f32.gmra.mxu0 %v342
      %v636 = vpop.f32.mrf.mxu0
      %v637 = vadd.f32 0.0, %v636
      %v638 = vpop.f32.mrf.mxu0
      %639 = vmatprep.mubr.f32.mxu0 0.0
      %640 = vmatmul.mubr.f32.gmra.mxu0 %v345
      %v641 = vpop.f32.mrf.mxu0
      %v642 = vadd.f32 0.0, %v641
      %v643 = vpop.f32.mrf.mxu0
      %644 = vmatprep.mubr.f32.mxu0 0.0
      %645 = vmatmul.mubr.f32.gmra.mxu0 %v348
      %v646 = vpop.f32.mrf.mxu0
      %v647 = vadd.f32 0.0, %v646
      %v648 = vpop.f32.mrf.mxu0
      %649 = vmatprep.mubr.f32.mxu0 0.0
      %650 = vmatmul.mubr.f32.gmra.mxu0 %v351
      %v651 = vpop.f32.mrf.mxu0
      %v652 = vadd.f32 0.0, %v651
      %v653 = vpop.f32.mrf.mxu0
      %654 = vmatprep.mubr.f32.mxu0 0.0
      %655 = vmatmul.mubr.f32.gmra.mxu0 %v354
      %v656 = vpop.f32.mrf.mxu0
      %v657 = vadd.f32 0.0, %v656
      %v658 = vpop.f32.mrf.mxu0
      %659 = vmatprep.mubr.f32.mxu0 0.0
      %660 = vmatmul.mubr.f32.gmra.mxu0 %v357
      %v661 = vpop.f32.mrf.mxu0
      %v662 = vadd.f32 0.0, %v661
      %v663 = vpop.f32.mrf.mxu0
      %664 = vdwg.mxu0
      %v665 = vmul.f32 %v426, %v428
      %v666 = vmul.f32 %v432, %v434
      %v667 = vmul.f32 %v438, %v440
      %v668 = vmul.f32 %v444, %v446
      %v669 = vmul.f32 %v450, %v452
      %v670 = vmul.f32 %v456, %v458
      %v671 = vmul.f32 %v462, %v464
      %v672 = vmul.f32 %v468, %v470
      %v673 = vmul.f32 %v474, %v476
      %v674 = vmul.f32 %v480, %v482
      %v675 = vmul.f32 %v486, %v488
      %v676 = vmul.f32 %v492, %v494
      %v677 = vmul.f32 %v498, %v500
      %v678 = vmul.f32 %v504, %v506
      %v679 = vmul.f32 %v510, %v512
      %v680 = vmul.f32 %v516, %v518
      %v681 = vld [vmem:[%s2] sm:$0xff]
      %v682 = vld [vmem:[%s2 + $0x8] sm:$0xff]
      %v683 = vld [vmem:[%s2 + $0x10] sm:$0xff]
      %v684 = vld [vmem:[%s2 + $0x18] sm:$0xff]
      %v685 = vld [vmem:[%s2 + $0x20] sm:$0xff]
      %v686 = vld [vmem:[%s2 + $0x28] sm:$0xff]
      %v687 = vld [vmem:[%s2 + $0x30] sm:$0xff]
      %v688 = vld [vmem:[%s2 + $0x38] sm:$0xff]
      %v689 = vld [vmem:[%s2 + $0x40] sm:$0xff]
      %v690 = vld [vmem:[%s2 + $0x48] sm:$0xff]
      %v691 = vld [vmem:[%s2 + $0x50] sm:$0xff]
      %v692 = vld [vmem:[%s2 + $0x58] sm:$0xff]
      %v693 = vld [vmem:[%s2 + $0x60] sm:$0xff]
      %v694 = vld [vmem:[%s2 + $0x68] sm:$0xff]
      %v695 = vld [vmem:[%s2 + $0x70] sm:$0xff]
      %v696 = vld [vmem:[%s2 + $0x78] sm:$0xff]
      %697 = vmatprep.subr.mxu0 0.0
      %698 = vmatpush1.msra.mxu0 %v696
      %699 = vmatprep.subr.mxu0 0.0
      %700 = vmatpush1.msra.mxu0 %v695
      %701 = vmatprep.subr.mxu0 0.0
      %702 = vmatpush1.msra.mxu0 %v694
      %703 = vmatprep.subr.mxu0 0.0
      %704 = vmatpush1.msra.mxu0 %v693
      %705 = vmatprep.subr.mxu0 0.0
      %706 = vmatpush1.msra.mxu0 %v692
      %707 = vmatprep.subr.mxu0 0.0
      %708 = vmatpush1.msra.mxu0 %v691
      %709 = vmatprep.subr.mxu0 0.0
      %710 = vmatpush1.msra.mxu0 %v690
      %711 = vmatprep.subr.mxu0 0.0
      %712 = vmatpush1.msra.mxu0 %v689
      %713 = vmatprep.subr.mxu0 0.0
      %714 = vmatpush1.msra.mxu0 %v688
      %715 = vmatprep.subr.mxu0 0.0
      %716 = vmatpush1.msra.mxu0 %v687
      %717 = vmatprep.subr.mxu0 0.0
      %718 = vmatpush1.msra.mxu0 %v686
      %719 = vmatprep.subr.mxu0 0.0
      %720 = vmatpush1.msra.mxu0 %v685
      %721 = vmatprep.subr.mxu0 0.0
      %722 = vmatpush1.msra.mxu0 %v684
      %723 = vmatprep.subr.mxu0 0.0
      %724 = vmatpush1.msra.mxu0 %v683
      %725 = vmatprep.subr.mxu0 0.0
      %726 = vmatpush1.msra.mxu0 %v682
      %727 = vmatprep.subr.mxu0 0.0
      %728 = vmatpush1.msra.mxu0 %v681
      %729 = vmatprep.subr.mxu0 0.0
      %730 = vmatpush2.msra.mxu0 0.0
      %731 = vmatprep.subr.mxu0 0.0
      %732 = vmatpush2.msra.mxu0 0.0
      %733 = vmatprep.subr.mxu0 0.0
      %734 = vmatpush2.msra.mxu0 0.0
      %735 = vmatprep.subr.mxu0 0.0
      %736 = vmatpush2.msra.mxu0 0.0
      %737 = vmatprep.subr.mxu0 0.0
      %738 = vmatpush2.msra.mxu0 0.0
      %739 = vmatprep.subr.mxu0 0.0
      %740 = vmatpush2.msra.mxu0 0.0
      %741 = vmatprep.subr.mxu0 0.0
      %742 = vmatpush2.msra.mxu0 0.0
      %743 = vmatprep.subr.mxu0 0.0
      %744 = vmatpush2.msra.mxu0 0.0
      %745 = vmatprep.subr.mxu0 0.0
      %746 = vmatpush2.msra.mxu0 0.0
      %747 = vmatprep.subr.mxu0 0.0
      %748 = vmatpush2.msra.mxu0 0.0
      %749 = vmatprep.subr.mxu0 0.0
      %750 = vmatpush2.msra.mxu0 0.0
      %751 = vmatprep.subr.mxu0 0.0
      %752 = vmatpush2.msra.mxu0 0.0
      %753 = vmatprep.subr.mxu0 0.0
      %754 = vmatpush2.msra.mxu0 0.0
      %755 = vmatprep.subr.mxu0 0.0
      %756 = vmatpush2.msra.mxu0 0.0
      %757 = vmatprep.subr.mxu0 0.0
      %758 = vmatpush2.msra.mxu0 0.0
      %759 = vmatprep.subr.mxu0 0.0
      %760 = vmatpush2.msra.mxu0 0.0
      %761 = vmatprep.mubr.f32.mxu0 0.0
      %762 = vmatmul.mubr.f32.gmra.mxu0 %v665
      %v763 = vpop.f32.mrf.mxu0
      %v764 = vadd.f32 0.0, %v763
      %v765 = vpop.f32.mrf.mxu0
      %766 = vmatprep.mubr.f32.mxu0 0.0
      %767 = vmatmul.mubr.f32.gmra.mxu0 %v666
      %v768 = vpop.f32.mrf.mxu0
      %v769 = vadd.f32 0.0, %v768
      %v770 = vpop.f32.mrf.mxu0
      %771 = vmatprep.mubr.f32.mxu0 0.0
      %772 = vmatmul.mubr.f32.gmra.mxu0 %v667
      %v773 = vpop.f32.mrf.mxu0
      %v774 = vadd.f32 0.0, %v773
      %v775 = vpop.f32.mrf.mxu0
      %776 = vmatprep.mubr.f32.mxu0 0.0
      %777 = vmatmul.mubr.f32.gmra.mxu0 %v668
      %v778 = vpop.f32.mrf.mxu0
      %v779 = vadd.f32 0.0, %v778
      %v780 = vpop.f32.mrf.mxu0
      %781 = vmatprep.mubr.f32.mxu0 0.0
      %782 = vmatmul.mubr.f32.gmra.mxu0 %v669
      %v783 = vpop.f32.mrf.mxu0
      %v784 = vadd.f32 0.0, %v783
      %v785 = vpop.f32.mrf.mxu0
      %786 = vmatprep.mubr.f32.mxu0 0.0
      %787 = vmatmul.mubr.f32.gmra.mxu0 %v670
      %v788 = vpop.f32.mrf.mxu0
      %v789 = vadd.f32 0.0, %v788
      %v790 = vpop.f32.mrf.mxu0
      %791 = vmatprep.mubr.f32.mxu0 0.0
      %792 = vmatmul.mubr.f32.gmra.mxu0 %v671
      %v793 = vpop.f32.mrf.mxu0
      %v794 = vadd.f32 0.0, %v793
      %v795 = vpop.f32.mrf.mxu0
      %796 = vmatprep.mubr.f32.mxu0 0.0
      %797 = vmatmul.mubr.f32.gmra.mxu0 %v672
      %v798 = vpop.f32.mrf.mxu0
      %v799 = vadd.f32 0.0, %v798
      %v800 = vpop.f32.mrf.mxu0
      %801 = vmatprep.mubr.f32.mxu0 0.0
      %802 = vmatmul.mubr.f32.gmra.mxu0 %v673
      %v803 = vpop.f32.mrf.mxu0
      %v804 = vadd.f32 0.0, %v803
      %v805 = vpop.f32.mrf.mxu0
      %806 = vmatprep.mubr.f32.mxu0 0.0
      %807 = vmatmul.mubr.f32.gmra.mxu0 %v674
      %v808 = vpop.f32.mrf.mxu0
      %v809 = vadd.f32 0.0, %v808
      %v810 = vpop.f32.mrf.mxu0
      %811 = vmatprep.mubr.f32.mxu0 0.0
      %812 = vmatmul.mubr.f32.gmra.mxu0 %v675
      %v813 = vpop.f32.mrf.mxu0
      %v814 = vadd.f32 0.0, %v813
      %v815 = vpop.f32.mrf.mxu0
      %816 = vmatprep.mubr.f32.mxu0 0.0
      %817 = vmatmul.mubr.f32.gmra.mxu0 %v676
      %v818 = vpop.f32.mrf.mxu0
      %v819 = vadd.f32 0.0, %v818
      %v820 = vpop.f32.mrf.mxu0
      %821 = vmatprep.mubr.f32.mxu0 0.0
      %822 = vmatmul.mubr.f32.gmra.mxu0 %v677
      %v823 = vpop.f32.mrf.mxu0
      %v824 = vadd.f32 0.0, %v823
      %v825 = vpop.f32.mrf.mxu0
      %826 = vmatprep.mubr.f32.mxu0 0.0
      %827 = vmatmul.mubr.f32.gmra.mxu0 %v678
      %v828 = vpop.f32.mrf.mxu0
      %v829 = vadd.f32 0.0, %v828
      %v830 = vpop.f32.mrf.mxu0
      %831 = vmatprep.mubr.f32.mxu0 0.0
      %832 = vmatmul.mubr.f32.gmra.mxu0 %v679
      %v833 = vpop.f32.mrf.mxu0
      %v834 = vadd.f32 0.0, %v833
      %v835 = vpop.f32.mrf.mxu0
      %836 = vmatprep.mubr.f32.mxu0 0.0
      %837 = vmatmul.mubr.f32.gmra.mxu0 %v680
      %v838 = vpop.f32.mrf.mxu0
      %v839 = vadd.f32 0.0, %v838
      %v840 = vpop.f32.mrf.mxu0
      %841 = vdwg.mxu0
      %vm842 = vcmask 130048
      %v843 = vsel %vm842, %v764, -inf
      %844 = vmax.xlane.f32.xlu0 %v843
      %v845 = vpop.xlane.xlu0 %844
      %v846 = vsel %vm842, %v769, -inf
      %847 = vmax.xlane.f32.xlu0 %v846
      %v848 = vpop.xlane.xlu0 %847
      %v849 = vsel %vm842, %v774, -inf
      %850 = vmax.xlane.f32.xlu0 %v849
      %v851 = vpop.xlane.xlu0 %850
      %v852 = vsel %vm842, %v779, -inf
      %853 = vmax.xlane.f32.xlu0 %v852
      %v854 = vpop.xlane.xlu0 %853
      %v855 = vsel %vm842, %v784, -inf
      %856 = vmax.xlane.f32.xlu0 %v855
      %v857 = vpop.xlane.xlu0 %856
      %v858 = vsel %vm842, %v789, -inf
      %859 = vmax.xlane.f32.xlu0 %v858
      %v860 = vpop.xlane.xlu0 %859
      %v861 = vsel %vm842, %v794, -inf
      %862 = vmax.xlane.f32.xlu0 %v861
      %v863 = vpop.xlane.xlu0 %862
      %v864 = vsel %vm842, %v799, -inf
      %865 = vmax.xlane.f32.xlu0 %v864
      %v866 = vpop.xlane.xlu0 %865
      %v867 = vsel %vm842, %v804, -inf
      %868 = vmax.xlane.f32.xlu0 %v867
      %v869 = vpop.xlane.xlu0 %868
      %v870 = vsel %vm842, %v809, -inf
      %871 = vmax.xlane.f32.xlu0 %v870
      %v872 = vpop.xlane.xlu0 %871
      %v873 = vsel %vm842, %v814, -inf
      %874 = vmax.xlane.f32.xlu0 %v873
      %v875 = vpop.xlane.xlu0 %874
      %v876 = vsel %vm842, %v819, -inf
      %877 = vmax.xlane.f32.xlu0 %v876
      %v878 = vpop.xlane.xlu0 %877
      %v879 = vsel %vm842, %v824, -inf
      %880 = vmax.xlane.f32.xlu0 %v879
      %v881 = vpop.xlane.xlu0 %880
      %v882 = vsel %vm842, %v829, -inf
      %883 = vmax.xlane.f32.xlu0 %v882
      %v884 = vpop.xlane.xlu0 %883
      %v885 = vsel %vm842, %v834, -inf
      %886 = vmax.xlane.f32.xlu0 %v885
      %v887 = vpop.xlane.xlu0 %886
      %v888 = vsel %vm842, %v839, -inf
      %889 = vmax.xlane.f32.xlu0 %v888
      %v890 = vpop.xlane.xlu0 %889
      %v891 = vsub.f32 %v764, %v845
      %v892 = vsub.f32 %v769, %v848
      %v893 = vsub.f32 %v774, %v851
      %v894 = vsub.f32 %v779, %v854
      %v895 = vsub.f32 %v784, %v857
      %v896 = vsub.f32 %v789, %v860
      %v897 = vsub.f32 %v794, %v863
      %v898 = vsub.f32 %v799, %v866
      %v899 = vsub.f32 %v804, %v869
      %v900 = vsub.f32 %v809, %v872
      %v901 = vsub.f32 %v814, %v875
      %v902 = vsub.f32 %v819, %v878
      %v903 = vsub.f32 %v824, %v881
      %v904 = vsub.f32 %v829, %v884
      %v905 = vsub.f32 %v834, %v887
      %v906 = vsub.f32 %v839, %v890
      %v907 = vmul.f32 %v891, 1.442695
      %v908 = vpow.pop %v907
      %v909 = vmul.f32 %v892, 1.442695
      %v910 = vpow.pop %v909
      %v911 = vmul.f32 %v893, 1.442695
      %v912 = vpow.pop %v911
      %v913 = vmul.f32 %v894, 1.442695
      %v914 = vpow.pop %v913
      %v915 = vmul.f32 %v895, 1.442695
      %v916 = vpow.pop %v915
      %v917 = vmul.f32 %v896, 1.442695
      %v918 = vpow.pop %v917
      %v919 = vmul.f32 %v897, 1.442695
      %v920 = vpow.pop %v919
      %v921 = vmul.f32 %v898, 1.442695
      %v922 = vpow.pop %v921
      %v923 = vmul.f32 %v899, 1.442695
      %v924 = vpow.pop %v923
      %v925 = vmul.f32 %v900, 1.442695
      %v926 = vpow.pop %v925
      %v927 = vmul.f32 %v901, 1.442695
      %v928 = vpow.pop %v927
      %v929 = vmul.f32 %v902, 1.442695
      %v930 = vpow.pop %v929
      %v931 = vmul.f32 %v903, 1.442695
      %v932 = vpow.pop %v931
      %v933 = vmul.f32 %v904, 1.442695
      %v934 = vpow.pop %v933
      %v935 = vmul.f32 %v905, 1.442695
      %v936 = vpow.pop %v935
      %v937 = vmul.f32 %v906, 1.442695
      %v938 = vpow.pop %v937
      %v939 = vld [vmem:[%s3] sm:$0xff]
      %v940 = vld [vmem:[%s3 + $0x8] sm:$0xff]
      %v942 = vsel %vm842, %v908, 0
      %v945 = vsel %vm842, %v910, 0
      %v948 = vsel %vm842, %v912, 0
      %v951 = vsel %vm842, %v914, 0
      %v954 = vsel %vm842, %v916, 0
      %v957 = vsel %vm842, %v918, 0
      %v960 = vsel %vm842, %v920, 0
      %v963 = vsel %vm842, %v922, 0
      %v966 = vsel %vm842, %v924, 0
      %v969 = vsel %vm842, %v926, 0
      %v972 = vsel %vm842, %v928, 0
      %v975 = vsel %vm842, %v930, 0
      %v978 = vsel %vm842, %v932, 0
      %v981 = vsel %vm842, %v934, 0
      %v984 = vsel %vm842, %v936, 0
      %v987 = vsel %vm842, %v938, 0
      %989 = vmatprep.subr.mxu0 0.0
      %990 = vmatpush1.msra.mxu0 0.0
      %991 = vmatprep.subr.mxu0 0.0
      %992 = vmatpush1.msra.mxu0 0.0
      %993 = vmatprep.subr.mxu0 0.0
      %994 = vmatpush1.msra.mxu0 0.0
      %995 = vmatprep.subr.mxu0 0.0
      %996 = vmatpush1.msra.mxu0 0.0
      %997 = vmatprep.subr.mxu0 0.0
      %998 = vmatpush1.msra.mxu0 0.0
      %999 = vmatprep.subr.mxu0 0.0
      %1000 = vmatpush1.msra.mxu0 0.0
      %1001 = vmatprep.subr.mxu0 0.0
      %1002 = vmatpush1.msra.mxu0 0.0
      %1003 = vmatprep.subr.mxu0 0.0
      %1004 = vmatpush1.msra.mxu0 0.0
      %1005 = vmatprep.subr.mxu0 0.0
      %1006 = vmatpush1.msra.mxu0 0.0
      %1007 = vmatprep.subr.mxu0 0.0
      %1008 = vmatpush1.msra.mxu0 0.0
      %1009 = vmatprep.subr.mxu0 0.0
      %1010 = vmatpush1.msra.mxu0 0.0
      %1011 = vmatprep.subr.mxu0 0.0
      %1012 = vmatpush1.msra.mxu0 0.0
      %1013 = vmatprep.subr.mxu0 0.0
      %1014 = vmatpush1.msra.mxu0 0.0
      %1015 = vmatprep.subr.mxu0 0.0
      %1016 = vmatpush1.msra.mxu0 0.0
      %1017 = vmatprep.subr.mxu0 0.0
      %1018 = vmatpush1.msra.mxu0 %v940
      %1019 = vmatprep.subr.mxu0 0.0
      %1020 = vmatpush1.msra.mxu0 %v939
      %1021 = vmatprep.subr.mxu0 0.0
      %1022 = vmatpush2.msra.mxu0 0.0
      %1023 = vmatprep.subr.mxu0 0.0
      %1024 = vmatpush2.msra.mxu0 0.0
      %1025 = vmatprep.subr.mxu0 0.0
      %1026 = vmatpush2.msra.mxu0 0.0
      %1027 = vmatprep.subr.mxu0 0.0
      %1028 = vmatpush2.msra.mxu0 0.0
      %1029 = vmatprep.subr.mxu0 0.0
      %1030 = vmatpush2.msra.mxu0 0.0
      %1031 = vmatprep.subr.mxu0 0.0
      %1032 = vmatpush2.msra.mxu0 0.0
      %1033 = vmatprep.subr.mxu0 0.0
      %1034 = vmatpush2.msra.mxu0 0.0
      %1035 = vmatprep.subr.mxu0 0.0
      %1036 = vmatpush2.msra.mxu0 0.0
      %1037 = vmatprep.subr.mxu0 0.0
      %1038 = vmatpush2.msra.mxu0 0.0
      %1039 = vmatprep.subr.mxu0 0.0
      %1040 = vmatpush2.msra.mxu0 0.0
      %1041 = vmatprep.subr.mxu0 0.0
      %1042 = vmatpush2.msra.mxu0 0.0
      %1043 = vmatprep.subr.mxu0 0.0
      %1044 = vmatpush2.msra.mxu0 0.0
      %1045 = vmatprep.subr.mxu0 0.0
      %1046 = vmatpush2.msra.mxu0 0.0
      %1047 = vmatprep.subr.mxu0 0.0
      %1048 = vmatpush2.msra.mxu0 0.0
      %1049 = vmatprep.subr.mxu0 0.0
      %1050 = vmatpush2.msra.mxu0 0.0
      %1051 = vmatprep.subr.mxu0 0.0
      %1052 = vmatpush2.msra.mxu0 0.0
      %1053 = vmatprep.mubr.f32.mxu0 0.0
      %1054 = vmatmul.mubr.f32.gmra.mxu0 %v942
      %v1055 = vpop.f32.mrf.mxu0
      %v1056 = vadd.f32 0.0, %v1055
      %v1057 = vpop.f32.mrf.mxu0
      %1058 = vmatprep.mubr.f32.mxu0 0.0
      %1059 = vmatmul.mubr.f32.gmra.mxu0 %v945
      %v1060 = vpop.f32.mrf.mxu0
      %v1061 = vadd.f32 0.0, %v1060
      %v1062 = vpop.f32.mrf.mxu0
      %1063 = vmatprep.mubr.f32.mxu0 0.0
      %1064 = vmatmul.mubr.f32.gmra.mxu0 %v948
      %v1065 = vpop.f32.mrf.mxu0
      %v1066 = vadd.f32 0.0, %v1065
      %v1067 = vpop.f32.mrf.mxu0
      %1068 = vmatprep.mubr.f32.mxu0 0.0
      %1069 = vmatmul.mubr.f32.gmra.mxu0 %v951
      %v1070 = vpop.f32.mrf.mxu0
      %v1071 = vadd.f32 0.0, %v1070
      %v1072 = vpop.f32.mrf.mxu0
      %1073 = vmatprep.mubr.f32.mxu0 0.0
      %1074 = vmatmul.mubr.f32.gmra.mxu0 %v954
      %v1075 = vpop.f32.mrf.mxu0
      %v1076 = vadd.f32 0.0, %v1075
      %v1077 = vpop.f32.mrf.mxu0
      %1078 = vmatprep.mubr.f32.mxu0 0.0
      %1079 = vmatmul.mubr.f32.gmra.mxu0 %v957
      %v1080 = vpop.f32.mrf.mxu0
      %v1081 = vadd.f32 0.0, %v1080
      %v1082 = vpop.f32.mrf.mxu0
      %1083 = vmatprep.mubr.f32.mxu0 0.0
      %1084 = vmatmul.mubr.f32.gmra.mxu0 %v960
      %v1085 = vpop.f32.mrf.mxu0
      %v1086 = vadd.f32 0.0, %v1085
      %v1087 = vpop.f32.mrf.mxu0
      %1088 = vmatprep.mubr.f32.mxu0 0.0
      %1089 = vmatmul.mubr.f32.gmra.mxu0 %v963
      %v1090 = vpop.f32.mrf.mxu0
      %v1091 = vadd.f32 0.0, %v1090
      %v1092 = vpop.f32.mrf.mxu0
      %1093 = vmatprep.mubr.f32.mxu0 0.0
      %1094 = vmatmul.mubr.f32.gmra.mxu0 %v966
      %v1095 = vpop.f32.mrf.mxu0
      %v1096 = vadd.f32 0.0, %v1095
      %v1097 = vpop.f32.mrf.mxu0
      %1098 = vmatprep.mubr.f32.mxu0 0.0
      %1099 = vmatmul.mubr.f32.gmra.mxu0 %v969
      %v1100 = vpop.f32.mrf.mxu0
      %v1101 = vadd.f32 0.0, %v1100
      %v1102 = vpop.f32.mrf.mxu0
      %1103 = vmatprep.mubr.f32.mxu0 0.0
      %1104 = vmatmul.mubr.f32.gmra.mxu0 %v972
      %v1105 = vpop.f32.mrf.mxu0
      %v1106 = vadd.f32 0.0, %v1105
      %v1107 = vpop.f32.mrf.mxu0
      %1108 = vmatprep.mubr.f32.mxu0 0.0
      %1109 = vmatmul.mubr.f32.gmra.mxu0 %v975
      %v1110 = vpop.f32.mrf.mxu0
      %v1111 = vadd.f32 0.0, %v1110
      %v1112 = vpop.f32.mrf.mxu0
      %1113 = vmatprep.mubr.f32.mxu0 0.0
      %1114 = vmatmul.mubr.f32.gmra.mxu0 %v978
      %v1115 = vpop.f32.mrf.mxu0
      %v1116 = vadd.f32 0.0, %v1115
      %v1117 = vpop.f32.mrf.mxu0
      %1118 = vmatprep.mubr.f32.mxu0 0.0
      %1119 = vmatmul.mubr.f32.gmra.mxu0 %v981
      %v1120 = vpop.f32.mrf.mxu0
      %v1121 = vadd.f32 0.0, %v1120
      %v1122 = vpop.f32.mrf.mxu0
      %1123 = vmatprep.mubr.f32.mxu0 0.0
      %1124 = vmatmul.mubr.f32.gmra.mxu0 %v984
      %v1125 = vpop.f32.mrf.mxu0
      %v1126 = vadd.f32 0.0, %v1125
      %v1127 = vpop.f32.mrf.mxu0
      %1128 = vmatprep.mubr.f32.mxu0 0.0
      %1129 = vmatmul.mubr.f32.gmra.mxu0 %v987
      %v1130 = vpop.f32.mrf.mxu0
      %v1131 = vadd.f32 0.0, %v1130
      %v1132 = vpop.f32.mrf.mxu0
      %1133 = vdwg.mxu0
      %v1134 = vrcp.pop %v1056
      %v1135 = vrcp.pop %v1061
      %v1136 = vrcp.pop %v1066
      %v1137 = vrcp.pop %v1071
      %v1138 = vrcp.pop %v1076
      %v1139 = vrcp.pop %v1081
      %v1140 = vrcp.pop %v1086
      %v1141 = vrcp.pop %v1091
      %v1142 = vrcp.pop %v1096
      %v1143 = vrcp.pop %v1101
      %v1144 = vrcp.pop %v1106
      %v1145 = vrcp.pop %v1111
      %v1146 = vrcp.pop %v1116
      %v1147 = vrcp.pop %v1121
      %v1148 = vrcp.pop %v1126
      %v1149 = vrcp.pop %v1131
      %v1150 = vmul.f32 %v908, %v1134
      %v1151 = vmul.f32 %v910, %v1135
      %v1152 = vmul.f32 %v912, %v1136
      %v1153 = vmul.f32 %v914, %v1137
      %v1154 = vmul.f32 %v916, %v1138
      %v1155 = vmul.f32 %v918, %v1139
      %v1156 = vmul.f32 %v920, %v1140
      %v1157 = vmul.f32 %v922, %v1141
      %v1158 = vmul.f32 %v924, %v1142
      %v1159 = vmul.f32 %v926, %v1143
      %v1160 = vmul.f32 %v928, %v1144
      %v1161 = vmul.f32 %v930, %v1145
      %v1162 = vmul.f32 %v932, %v1146
      %v1163 = vmul.f32 %v934, %v1147
      %v1164 = vmul.f32 %v936, %v1148
      %v1165 = vmul.f32 %v938, %v1149
      %v1166 = vld [vmem:[%s4] sm:$0xff]
      %v1167 = vld [vmem:[%s4 + $0x8] sm:$0xff]
      %v1169 = vsel %vm842, %v1150, 0
      %v1172 = vsel %vm842, %v1151, 0
      %v1175 = vsel %vm842, %v1152, 0
      %v1178 = vsel %vm842, %v1153, 0
      %v1181 = vsel %vm842, %v1154, 0
      %v1184 = vsel %vm842, %v1155, 0
      %v1187 = vsel %vm842, %v1156, 0
      %v1190 = vsel %vm842, %v1157, 0
      %v1193 = vsel %vm842, %v1158, 0
      %v1196 = vsel %vm842, %v1159, 0
      %v1199 = vsel %vm842, %v1160, 0
      %v1202 = vsel %vm842, %v1161, 0
      %v1205 = vsel %vm842, %v1162, 0
      %v1208 = vsel %vm842, %v1163, 0
      %v1211 = vsel %vm842, %v1164, 0
      %v1214 = vsel %vm842, %v1165, 0
      %1216 = vmatprep.subr.mxu0 0.0
      %1217 = vmatpush1.msra.mxu0 0.0
      %1218 = vmatprep.subr.mxu0 0.0
      %1219 = vmatpush1.msra.mxu0 0.0
      %1220 = vmatprep.subr.mxu0 0.0
      %1221 = vmatpush1.msra.mxu0 0.0
      %1222 = vmatprep.subr.mxu0 0.0
      %1223 = vmatpush1.msra.mxu0 0.0
      %1224 = vmatprep.subr.mxu0 0.0
      %1225 = vmatpush1.msra.mxu0 0.0
      %1226 = vmatprep.subr.mxu0 0.0
      %1227 = vmatpush1.msra.mxu0 0.0
      %1228 = vmatprep.subr.mxu0 0.0
      %1229 = vmatpush1.msra.mxu0 0.0
      %1230 = vmatprep.subr.mxu0 0.0
      %1231 = vmatpush1.msra.mxu0 0.0
      %1232 = vmatprep.subr.mxu0 0.0
      %1233 = vmatpush1.msra.mxu0 0.0
      %1234 = vmatprep.subr.mxu0 0.0
      %1235 = vmatpush1.msra.mxu0 0.0
      %1236 = vmatprep.subr.mxu0 0.0
      %1237 = vmatpush1.msra.mxu0 0.0
      %1238 = vmatprep.subr.mxu0 0.0
      %1239 = vmatpush1.msra.mxu0 0.0
      %1240 = vmatprep.subr.mxu0 0.0
      %1241 = vmatpush1.msra.mxu0 0.0
      %1242 = vmatprep.subr.mxu0 0.0
      %1243 = vmatpush1.msra.mxu0 0.0
      %1244 = vmatprep.subr.mxu0 0.0
      %1245 = vmatpush1.msra.mxu0 %v1167
      %1246 = vmatprep.subr.mxu0 0.0
      %1247 = vmatpush1.msra.mxu0 %v1166
      %1248 = vmatprep.subr.mxu0 0.0
      %1249 = vmatpush2.msra.mxu0 0.0
      %1250 = vmatprep.subr.mxu0 0.0
      %1251 = vmatpush2.msra.mxu0 0.0
      %1252 = vmatprep.subr.mxu0 0.0
      %1253 = vmatpush2.msra.mxu0 0.0
      %1254 = vmatprep.subr.mxu0 0.0
      %1255 = vmatpush2.msra.mxu0 0.0
      %1256 = vmatprep.subr.mxu0 0.0
      %1257 = vmatpush2.msra.mxu0 0.0
      %1258 = vmatprep.subr.mxu0 0.0
      %1259 = vmatpush2.msra.mxu0 0.0
      %1260 = vmatprep.subr.mxu0 0.0
      %1261 = vmatpush2.msra.mxu0 0.0
      %1262 = vmatprep.subr.mxu0 0.0
      %1263 = vmatpush2.msra.mxu0 0.0
      %1264 = vmatprep.subr.mxu0 0.0
      %1265 = vmatpush2.msra.mxu0 0.0
      %1266 = vmatprep.subr.mxu0 0.0
      %1267 = vmatpush2.msra.mxu0 0.0
      %1268 = vmatprep.subr.mxu0 0.0
      %1269 = vmatpush2.msra.mxu0 0.0
      %1270 = vmatprep.subr.mxu0 0.0
      %1271 = vmatpush2.msra.mxu0 0.0
      %1272 = vmatprep.subr.mxu0 0.0
      %1273 = vmatpush2.msra.mxu0 0.0
      %1274 = vmatprep.subr.mxu0 0.0
      %1275 = vmatpush2.msra.mxu0 0.0
      %1276 = vmatprep.subr.mxu0 0.0
      %1277 = vmatpush2.msra.mxu0 0.0
      %1278 = vmatprep.subr.mxu0 0.0
      %1279 = vmatpush2.msra.mxu0 0.0
      %1280 = vmatprep.mubr.f32.mxu0 0.0
      %1281 = vmatmul.mubr.f32.gmra.mxu0 %v1169
      %v1282 = vpop.f32.mrf.mxu0
      %v1283 = vadd.f32 0.0, %v1282
      %v1284 = vpop.f32.mrf.mxu0
      %1285 = vmatprep.mubr.f32.mxu0 0.0
      %1286 = vmatmul.mubr.f32.gmra.mxu0 %v1172
      %v1287 = vpop.f32.mrf.mxu0
      %v1288 = vadd.f32 0.0, %v1287
      %v1289 = vpop.f32.mrf.mxu0
      %1290 = vmatprep.mubr.f32.mxu0 0.0
      %1291 = vmatmul.mubr.f32.gmra.mxu0 %v1175
      %v1292 = vpop.f32.mrf.mxu0
      %v1293 = vadd.f32 0.0, %v1292
      %v1294 = vpop.f32.mrf.mxu0
      %1295 = vmatprep.mubr.f32.mxu0 0.0
      %1296 = vmatmul.mubr.f32.gmra.mxu0 %v1178
      %v1297 = vpop.f32.mrf.mxu0
      %v1298 = vadd.f32 0.0, %v1297
      %v1299 = vpop.f32.mrf.mxu0
      %1300 = vmatprep.mubr.f32.mxu0 0.0
      %1301 = vmatmul.mubr.f32.gmra.mxu0 %v1181
      %v1302 = vpop.f32.mrf.mxu0
      %v1303 = vadd.f32 0.0, %v1302
      %v1304 = vpop.f32.mrf.mxu0
      %1305 = vmatprep.mubr.f32.mxu0 0.0
      %1306 = vmatmul.mubr.f32.gmra.mxu0 %v1184
      %v1307 = vpop.f32.mrf.mxu0
      %v1308 = vadd.f32 0.0, %v1307
      %v1309 = vpop.f32.mrf.mxu0
      %1310 = vmatprep.mubr.f32.mxu0 0.0
      %1311 = vmatmul.mubr.f32.gmra.mxu0 %v1187
      %v1312 = vpop.f32.mrf.mxu0
      %v1313 = vadd.f32 0.0, %v1312
      %v1314 = vpop.f32.mrf.mxu0
      %1315 = vmatprep.mubr.f32.mxu0 0.0
      %1316 = vmatmul.mubr.f32.gmra.mxu0 %v1190
      %v1317 = vpop.f32.mrf.mxu0
      %v1318 = vadd.f32 0.0, %v1317
      %v1319 = vpop.f32.mrf.mxu0
      %1320 = vmatprep.mubr.f32.mxu0 0.0
      %1321 = vmatmul.mubr.f32.gmra.mxu0 %v1193
      %v1322 = vpop.f32.mrf.mxu0
      %v1323 = vadd.f32 0.0, %v1322
      %v1324 = vpop.f32.mrf.mxu0
      %1325 = vmatprep.mubr.f32.mxu0 0.0
      %1326 = vmatmul.mubr.f32.gmra.mxu0 %v1196
      %v1327 = vpop.f32.mrf.mxu0
      %v1328 = vadd.f32 0.0, %v1327
      %v1329 = vpop.f32.mrf.mxu0
      %1330 = vmatprep.mubr.f32.mxu0 0.0
      %1331 = vmatmul.mubr.f32.gmra.mxu0 %v1199
      %v1332 = vpop.f32.mrf.mxu0
      %v1333 = vadd.f32 0.0, %v1332
      %v1334 = vpop.f32.mrf.mxu0
      %1335 = vmatprep.mubr.f32.mxu0 0.0
      %1336 = vmatmul.mubr.f32.gmra.mxu0 %v1202
      %v1337 = vpop.f32.mrf.mxu0
      %v1338 = vadd.f32 0.0, %v1337
      %v1339 = vpop.f32.mrf.mxu0
      %1340 = vmatprep.mubr.f32.mxu0 0.0
      %1341 = vmatmul.mubr.f32.gmra.mxu0 %v1205
      %v1342 = vpop.f32.mrf.mxu0
      %v1343 = vadd.f32 0.0, %v1342
      %v1344 = vpop.f32.mrf.mxu0
      %1345 = vmatprep.mubr.f32.mxu0 0.0
      %1346 = vmatmul.mubr.f32.gmra.mxu0 %v1208
      %v1347 = vpop.f32.mrf.mxu0
      %v1348 = vadd.f32 0.0, %v1347
      %v1349 = vpop.f32.mrf.mxu0
      %1350 = vmatprep.mubr.f32.mxu0 0.0
      %1351 = vmatmul.mubr.f32.gmra.mxu0 %v1211
      %v1352 = vpop.f32.mrf.mxu0
      %v1353 = vadd.f32 0.0, %v1352
      %v1354 = vpop.f32.mrf.mxu0
      %1355 = vmatprep.mubr.f32.mxu0 0.0
      %1356 = vmatmul.mubr.f32.gmra.mxu0 %v1214
      %v1357 = vpop.f32.mrf.mxu0
      %v1358 = vadd.f32 0.0, %v1357
      %v1359 = vpop.f32.mrf.mxu0
      %1360 = vdwg.mxu0
      %v1361 = vmul.f32 %v1283, %v587
      %v1362 = vmul.f32 %v1288, %v592
      %v1363 = vmul.f32 %v1293, %v597
      %v1364 = vmul.f32 %v1298, %v602
      %v1365 = vmul.f32 %v1303, %v607
      %v1366 = vmul.f32 %v1308, %v612
      %v1367 = vmul.f32 %v1313, %v617
      %v1368 = vmul.f32 %v1318, %v622
      %v1369 = vmul.f32 %v1323, %v627
      %v1370 = vmul.f32 %v1328, %v632
      %v1371 = vmul.f32 %v1333, %v637
      %v1372 = vmul.f32 %v1338, %v642
      %v1373 = vmul.f32 %v1343, %v647
      %v1374 = vmul.f32 %v1348, %v652
      %v1375 = vmul.f32 %v1353, %v657
      %v1376 = vmul.f32 %v1358, %v662
      %v1377 = vld [vmem:[%s5] sm:$0xff]
      %v1378 = vld [vmem:[%s5 + $0x8] sm:$0xff]
      %v1379 = vld [vmem:[%s5 + $0x10] sm:$0xff]
      %v1380 = vld [vmem:[%s5 + $0x18] sm:$0xff]
      %v1381 = vld [vmem:[%s5 + $0x20] sm:$0xff]
      %v1382 = vld [vmem:[%s5 + $0x28] sm:$0xff]
      %v1383 = vld [vmem:[%s5 + $0x30] sm:$0xff]
      %v1384 = vld [vmem:[%s5 + $0x38] sm:$0xff]
      %v1385 = vld [vmem:[%s5 + $0x40] sm:$0xff]
      %v1386 = vld [vmem:[%s5 + $0x48] sm:$0xff]
      %v1387 = vld [vmem:[%s5 + $0x50] sm:$0xff]
      %v1388 = vld [vmem:[%s5 + $0x58] sm:$0xff]
      %v1389 = vld [vmem:[%s5 + $0x60] sm:$0xff]
      %v1390 = vld [vmem:[%s5 + $0x68] sm:$0xff]
      %v1391 = vld [vmem:[%s5 + $0x70] sm:$0xff]
      %v1392 = vld [vmem:[%s5 + $0x78] sm:$0xff]
      %v1393 = vld [vmem:[%s6] sm:$0x1]
      %v1395 = vlaneseq
      %v1396 = vshrl.u32 %v1395, 7
      %v1397 = vsub.s32 0, %v1396
      %v1398 = vrot.slane %v1393, %v1397
      %1400 = vmatprep.subr.mxu0 0.0
      %1401 = vmatpush1.msra.mxu0 %v1392
      %1402 = vmatprep.subr.mxu0 0.0
      %1403 = vmatpush1.msra.mxu0 %v1391
      %1404 = vmatprep.subr.mxu0 0.0
      %1405 = vmatpush1.msra.mxu0 %v1390
      %1406 = vmatprep.subr.mxu0 0.0
      %1407 = vmatpush1.msra.mxu0 %v1389
      %1408 = vmatprep.subr.mxu0 0.0
      %1409 = vmatpush1.msra.mxu0 %v1388
      %1410 = vmatprep.subr.mxu0 0.0
      %1411 = vmatpush1.msra.mxu0 %v1387
      %1412 = vmatprep.subr.mxu0 0.0
      %1413 = vmatpush1.msra.mxu0 %v1386
      %1414 = vmatprep.subr.mxu0 0.0
      %1415 = vmatpush1.msra.mxu0 %v1385
      %1416 = vmatprep.subr.mxu0 0.0
      %1417 = vmatpush1.msra.mxu0 %v1384
      %1418 = vmatprep.subr.mxu0 0.0
      %1419 = vmatpush1.msra.mxu0 %v1383
      %1420 = vmatprep.subr.mxu0 0.0
      %1421 = vmatpush1.msra.mxu0 %v1382
      %1422 = vmatprep.subr.mxu0 0.0
      %1423 = vmatpush1.msra.mxu0 %v1381
      %1424 = vmatprep.subr.mxu0 0.0
      %1425 = vmatpush1.msra.mxu0 %v1380
      %1426 = vmatprep.subr.mxu0 0.0
      %1427 = vmatpush1.msra.mxu0 %v1379
      %1428 = vmatprep.subr.mxu0 0.0
      %1429 = vmatpush1.msra.mxu0 %v1378
      %1430 = vmatprep.subr.mxu0 0.0
      %1431 = vmatpush1.msra.mxu0 %v1377
      %1432 = vmatprep.subr.mxu0 0.0
      %1433 = vmatpush2.msra.mxu0 0.0
      %1434 = vmatprep.subr.mxu0 0.0
      %1435 = vmatpush2.msra.mxu0 0.0
      %1436 = vmatprep.subr.mxu0 0.0
      %1437 = vmatpush2.msra.mxu0 0.0
      %1438 = vmatprep.subr.mxu0 0.0
      %1439 = vmatpush2.msra.mxu0 0.0
      %1440 = vmatprep.subr.mxu0 0.0
      %1441 = vmatpush2.msra.mxu0 0.0
      %1442 = vmatprep.subr.mxu0 0.0
      %1443 = vmatpush2.msra.mxu0 0.0
      %1444 = vmatprep.subr.mxu0 0.0
      %1445 = vmatpush2.msra.mxu0 0.0
      %1446 = vmatprep.subr.mxu0 0.0
      %1447 = vmatpush2.msra.mxu0 0.0
      %1448 = vmatprep.subr.mxu0 0.0
      %1449 = vmatpush2.msra.mxu0 0.0
      %1450 = vmatprep.subr.mxu0 0.0
      %1451 = vmatpush2.msra.mxu0 0.0
      %1452 = vmatprep.subr.mxu0 0.0
      %1453 = vmatpush2.msra.mxu0 0.0
      %1454 = vmatprep.subr.mxu0 0.0
      %1455 = vmatpush2.msra.mxu0 0.0
      %1456 = vmatprep.subr.mxu0 0.0
      %1457 = vmatpush2.msra.mxu0 0.0
      %1458 = vmatprep.subr.mxu0 0.0
      %1459 = vmatpush2.msra.mxu0 0.0
      %1460 = vmatprep.subr.mxu0 0.0
      %1461 = vmatpush2.msra.mxu0 0.0
      %1462 = vmatprep.subr.mxu0 0.0
      %1463 = vmatpush2.msra.mxu0 0.0
      %1464 = vmatprep.mubr.f32.mxu0 0.0
      %1465 = vmatmul.mubr.f32.gmra.mxu0 %v1361
      %v1466 = vpop.f32.mrf.mxu0
      %v1467 = vadd.f32 %v1398, %v1466
      %v1468 = vpop.f32.mrf.mxu0
      %1469 = vmatprep.mubr.f32.mxu0 0.0
      %1470 = vmatmul.mubr.f32.gmra.mxu0 %v1362
      %v1471 = vpop.f32.mrf.mxu0
      %v1472 = vadd.f32 %v1398, %v1471
      %v1473 = vpop.f32.mrf.mxu0
      %1474 = vmatprep.mubr.f32.mxu0 0.0
      %1475 = vmatmul.mubr.f32.gmra.mxu0 %v1363
      %v1476 = vpop.f32.mrf.mxu0
      %v1477 = vadd.f32 %v1398, %v1476
      %v1478 = vpop.f32.mrf.mxu0
      %1479 = vmatprep.mubr.f32.mxu0 0.0
      %1480 = vmatmul.mubr.f32.gmra.mxu0 %v1364
      %v1481 = vpop.f32.mrf.mxu0
      %v1482 = vadd.f32 %v1398, %v1481
      %v1483 = vpop.f32.mrf.mxu0
      %1484 = vmatprep.mubr.f32.mxu0 0.0
      %1485 = vmatmul.mubr.f32.gmra.mxu0 %v1365
      %v1486 = vpop.f32.mrf.mxu0
      %v1487 = vadd.f32 %v1398, %v1486
      %v1488 = vpop.f32.mrf.mxu0
      %1489 = vmatprep.mubr.f32.mxu0 0.0
      %1490 = vmatmul.mubr.f32.gmra.mxu0 %v1366
      %v1491 = vpop.f32.mrf.mxu0
      %v1492 = vadd.f32 %v1398, %v1491
      %v1493 = vpop.f32.mrf.mxu0
      %1494 = vmatprep.mubr.f32.mxu0 0.0
      %1495 = vmatmul.mubr.f32.gmra.mxu0 %v1367
      %v1496 = vpop.f32.mrf.mxu0
      %v1497 = vadd.f32 %v1398, %v1496
      %v1498 = vpop.f32.mrf.mxu0
      %1499 = vmatprep.mubr.f32.mxu0 0.0
      %1500 = vmatmul.mubr.f32.gmra.mxu0 %v1368
      %v1501 = vpop.f32.mrf.mxu0
      %v1502 = vadd.f32 %v1398, %v1501
      %v1503 = vpop.f32.mrf.mxu0
      %1504 = vmatprep.mubr.f32.mxu0 0.0
      %1505 = vmatmul.mubr.f32.gmra.mxu0 %v1369
      %v1506 = vpop.f32.mrf.mxu0
      %v1507 = vadd.f32 %v1398, %v1506
      %v1508 = vpop.f32.mrf.mxu0
      %1509 = vmatprep.mubr.f32.mxu0 0.0
      %1510 = vmatmul.mubr.f32.gmra.mxu0 %v1370
      %v1511 = vpop.f32.mrf.mxu0
      %v1512 = vadd.f32 %v1398, %v1511
      %v1513 = vpop.f32.mrf.mxu0
      %1514 = vmatprep.mubr.f32.mxu0 0.0
      %1515 = vmatmul.mubr.f32.gmra.mxu0 %v1371
      %v1516 = vpop.f32.mrf.mxu0
      %v1517 = vadd.f32 %v1398, %v1516
      %v1518 = vpop.f32.mrf.mxu0
      %1519 = vmatprep.mubr.f32.mxu0 0.0
      %1520 = vmatmul.mubr.f32.gmra.mxu0 %v1372
      %v1521 = vpop.f32.mrf.mxu0
      %v1522 = vadd.f32 %v1398, %v1521
      %v1523 = vpop.f32.mrf.mxu0
      %1524 = vmatprep.mubr.f32.mxu0 0.0
      %1525 = vmatmul.mubr.f32.gmra.mxu0 %v1373
      %v1526 = vpop.f32.mrf.mxu0
      %v1527 = vadd.f32 %v1398, %v1526
      %v1528 = vpop.f32.mrf.mxu0
      %1529 = vmatprep.mubr.f32.mxu0 0.0
      %1530 = vmatmul.mubr.f32.gmra.mxu0 %v1374
      %v1531 = vpop.f32.mrf.mxu0
      %v1532 = vadd.f32 %v1398, %v1531
      %v1533 = vpop.f32.mrf.mxu0
      %1534 = vmatprep.mubr.f32.mxu0 0.0
      %1535 = vmatmul.mubr.f32.gmra.mxu0 %v1375
      %v1536 = vpop.f32.mrf.mxu0
      %v1537 = vadd.f32 %v1398, %v1536
      %v1538 = vpop.f32.mrf.mxu0
      %1539 = vmatprep.mubr.f32.mxu0 0.0
      %1540 = vmatmul.mubr.f32.gmra.mxu0 %v1376
      %v1541 = vpop.f32.mrf.mxu0
      %v1542 = vadd.f32 %v1398, %v1541
      %v1543 = vpop.f32.mrf.mxu0
      %1544 = vdwg.mxu0
      %1545 = vst.msk [vmem:[%s280] sm:$0xff] %vm842, %v1467
      %1546 = vst.msk [vmem:[%s280 + $0x8] sm:$0xff] %vm842, %v1472
      %1547 = vst.msk [vmem:[%s280 + $0x10] sm:$0xff] %vm842, %v1477
      %1548 = vst.msk [vmem:[%s280 + $0x18] sm:$0xff] %vm842, %v1482
      %1549 = vst.msk [vmem:[%s280 + $0x20] sm:$0xff] %vm842, %v1487
      %1550 = vst.msk [vmem:[%s280 + $0x28] sm:$0xff] %vm842, %v1492
      %1551 = vst.msk [vmem:[%s280 + $0x30] sm:$0xff] %vm842, %v1497
      %1552 = vst.msk [vmem:[%s280 + $0x38] sm:$0xff] %vm842, %v1502
      %1553 = vst.msk [vmem:[%s280 + $0x40] sm:$0xff] %vm842, %v1507
      %1554 = vst.msk [vmem:[%s280 + $0x48] sm:$0xff] %vm842, %v1512
      %1555 = vst.msk [vmem:[%s280 + $0x50] sm:$0xff] %vm842, %v1517
      %1556 = vst.msk [vmem:[%s280 + $0x58] sm:$0xff] %vm842, %v1522
      %1557 = vst.msk [vmem:[%s280 + $0x60] sm:$0xff] %vm842, %v1527
      %1558 = vst.msk [vmem:[%s280 + $0x68] sm:$0xff] %vm842, %v1532
      %1559 = vst.msk [vmem:[%s280 + $0x70] sm:$0xff] %vm842, %v1537
      %1560 = vst.msk [vmem:[%s280 + $0x78] sm:$0xff] %vm842, %v1542
      %s1561 = smul.u32 16, %s18
      %p1562 = scmp.lt.s32.totalorder %s1561, 31
      %s1563 = scalar_select %p1562, %s1561, 31
      %s1564 = smul.addr %s1563, 8
      %s1565 = scalar_lea.vmem %s7, %s1564
      // Predicated region
      $region49: #{tpu_custom_call.1} parent=47 // pred_check
        %p1566 = pneg %p188
      $region50: #{tpu_custom_call.1} parent=47 // pred_check_branch
        %1568 = sbr.rel (%p1566) target = $region52
      $region51: #{tpu_custom_call.1} parent=47 // pred_region
        %s1569 = smul.u32 16, %s18
      $region52: #{tpu_custom_call.1} parent=47 // pred_fallthru
        _
    $region48: #{tpu_custom_call.1} parent=5 // pred_fallthru
      _
    %p1570 = scmp.le.s32.totalorder 2, %s13
    // Predicated region
    $region53: #{tpu_custom_call.1} parent=5 // pred_check
      %p1571 = pneg %p1570
    $region54: #{tpu_custom_call.1} parent=5 // pred_check_branch
      %1573 = sbr.rel (%p1571) target = $region56
    $region55: #{tpu_custom_call.1} parent=5 // pred_region
      %s1574 = ssub.s32 %s13, 2
      // Predicated region
      $region57: #{tpu_custom_call.1} parent=55 // pred_check
        %p1575 = pneg %p194
      $region58: #{tpu_custom_call.1} parent=55 // pred_check_branch
        %1577 = sbr.rel (%p1575) target = $region60
      $region59: #{tpu_custom_call.1} parent=55 // pred_region
        %s1578 = smul.u32 16, %s19
        %p1579 = scmp.lt.s32.totalorder %s1578, 31
        %s1580 = scalar_select %p1579, %s1578, 31
        %s1581 = smul.addr %s1580, 8
        %s1582 = scalar_lea.vmem %s7, %s1581
      $region60: #{tpu_custom_call.1} parent=55 // pred_fallthru
        _
    $region56: #{tpu_custom_call.1} parent=5 // pred_fallthru
      _
  $region6: #{tpu_custom_call.1} parent=0 // loop_footer
    %s17 = sadd.s32 1, %s13
  $region7: #{tpu_custom_call.1} parent=0 // loop_footer_branch
    %12 = sbr.rel target = $region3
  $region8: #{tpu_custom_call.1} parent=0 // loop_exit
    _

</llo_original>
